<compile_context>
chip_gen: v5e
topology: v5e:2x2
jax: 0.10.0
libtpu: 0.0.40
codegen_flags: <defaults>
</compile_context>

<pallas_src>
import math

import numpy as np

import jax
import jax.numpy as jnp
from jax.experimental import pallas as pl
from jax.experimental.pallas import tpu as pltpu


def _round_up(v, m):
    return (v + m - 1) // m * m


def _make_kernel(num_layers, shifts):
    """Fused num_layers x (3x3 conv + bias) on a lane-packed (c_pad, block_n*F) slab."""

    def kernel(x_ref, w_ref, bm_ref, mask_ref, out_ref):
        mask = mask_ref[...]                 # (1, Lw) 0/1 interior mask (tiled per sample)
        a = x_ref[0]                         # (c_pad, Lw) flat activations, samples on lanes
        for l in range(num_layers):          # static: strict dataflow chain, low live-range
            # im2col via circular lane rolls (one per 3x3 tap, center tap is the identity).
            # Wrap / cross-sample garbage only contaminates halo output lanes, which the
            # mask below zeroes anyway -> no unaligned lane concats, full 128-mult width.
            cols = jnp.concatenate(
                [a if s == 0 else pltpu.roll(a, shift=s, axis=1) for s in shifts],
                axis=0)                      # (9*c_pad, Lw), sublane-aligned concat
            # One MXU matmul per layer over all samples at once.
            acc = jnp.dot(w_ref[l], cols, preferred_element_type=jnp.float32)
            # Fused bias add + halo zeroing: bm = bias * mask (precomputed per layer).
            a = acc * mask + bm_ref[l]       # (c_pad, Lw), halo lanes exactly 0
        out_ref[0] = a                       # lane-dense store

    return kernel


def destylerv3_forward(x, weights, biases, *, padding_first=0, stride_first=1,
                       equalized_lr=True, block_n=None):
    """
    x:       (N, C_in, H, W) float32, NCHW (PyTorch layout).
    weights: list of (C_out, C_in_l, 3, 3) conv weights (PyTorch OIHW layout).
    biases:  list of (C_out,) biases.
    Returns  (N, C_out, H_out, W_out) float32, NCHW.
    """
    assert stride_first == 1, "stride_first != 1 (downsample) not implemented"

    N, c_in, H0, W0 = x.shape
    num_layers = len(weights)
    c_out = weights[0].shape[0]
    p1 = int(padding_first)

    H1, W1 = H0 + 2 * p1 - 2, W0 + 2 * p1 - 2          # spatial dims after layer 1
    assert H1 >= 1 and W1 >= 1
    Hp, Wp = H1 + 2, W1 + 2                            # padded dims of every intermediate
    F = Hp * Wp                                        # flat padded spatial length
    t0 = Wp + 1                                        # center-tap flat offset

    # one common padded channel count keeps all layers / activations uniform (stacked weights)
    c_pad = _round_up(max(c_in, c_out), 8)

    # ---- grid / block_n: 1 step on single-TC (v5e/v6e), 2 parallel steps on dual-TC v7x ----
    if block_n is None:
        two_tc = False
        try:
            kind = jax.devices()[0].device_kind.lower()
            two_tc = ("v7" in kind) or ("7x" in kind)
        except Exception:
            two_tc = False
        if two_tc and N >= 2 and N % 2 == 0:
            block_n = N // 2
        else:
            block_n = N
    assert N % block_n == 0
    num_blocks = N // block_n
    Lw = block_n * F                                   # lane width of one grid step

    # VMEM footprint per grid step (double-buffered in/out slabs + resident operands).
    # Re-derive block_n / set vmem_limit_bytes before scaling H, W or N up (v7x: 64 MiB VMEM).
    vmem_est = 4 * (2 * 2 * c_pad * Lw
                    + num_layers * c_pad * (9 * c_pad + Lw)
                    + Lw)
    assert vmem_est < 16 * 1024 * 1024, "per-step VMEM footprint too large; shrink block_n"

    # ---- inputs -----------------------------------------------------------------------
    if p1 > 0:
        x = jnp.pad(x, ((0, 0), (0, 0), (p1, p1), (p1, p1)))   # only if padding_first > 0
    if c_pad > c_in:
        x = jnp.pad(x, ((0, 0), (0, c_pad - c_in), (0, 0), (0, 0)))
    x = x.astype(jnp.float32)
    assert x.shape[2] == Hp and x.shape[3] == Wp, "flat-conv row-stride mismatch"

    # (N, c_pad, Hp, Wp) -> (num_blocks, c_pad, block_n*F): samples packed along lanes.
    x_blk = (x.reshape(N, c_pad, F)
              .reshape(num_blocks, block_n, c_pad, F)
              .transpose(0, 2, 1, 3)
              .reshape(num_blocks, c_pad, Lw))

    # ---- fold 3x3 taps (+ equalized-lr scale) into stacked (num_layers, c_pad, 9*c_pad) ----
    wmats, bvecs = [], []
    ci_prev = c_in
    for w, b in zip(weights, biases):
        co, ci, kh, kw = w.shape
        assert (kh, kw) == (3, 3) and ci == ci_prev and co == c_out
        scale = 1.0 / math.sqrt(ci * kh * kw) if equalized_lr else 1.0
        wl = jnp.asarray(w, jnp.float32) * scale
        wl = jnp.pad(wl, ((0, c_pad - co), (0, c_pad - ci), (0, 0), (0, 0)))
        # (c_pad, c_pad, 3, 3) -> (c_pad, kh, kw, c_pad) -> (c_pad, 9*c_pad); tap order
        # (kh-major, kw, channel innermost) matches the in-kernel roll/concat order.
        wl = jnp.transpose(wl, (0, 2, 3, 1)).reshape(c_pad, 9 * c_pad)
        wmats.append(wl)
        bvecs.append(jnp.pad(jnp.asarray(b, jnp.float32), (0, c_pad - co)))
        ci_prev = co
    w_all = jnp.stack(wmats, axis=0)                   # (num_layers, c_pad, 9*c_pad)

    # ---- full-width 0/1 interior mask + precomputed bias*mask per layer ------------------
    rr = np.arange(F) // Wp
    cc = np.arange(F) % Wp
    interior = ((rr >= 1) & (rr <= Hp - 2) & (cc >= 1) & (cc <= Wp - 2)).astype(np.float32)
    mask_f = jnp.asarray(np.tile(interior, block_n)[None, :])          # (1, Lw)
    b_stack = jnp.stack(bvecs, axis=0)                                 # (num_layers, c_pad)
    bm_all = b_stack[:, :, None] * mask_f[None, :, :]                  # (num_layers, c_pad, Lw)

    # roll amounts (jnp.roll convention, non-negative): cols_d[:, m] = a[:, (m + d - t0) % Lw]
    offsets = [kh_ * Wp + kw_ for kh_ in range(3) for kw_ in range(3)]
    shifts = [(t0 - d) % Lw for d in offsets]

    kernel = _make_kernel(num_layers, shifts)

    out_blk = pl.pallas_call(
        kernel,
        out_shape=jax.ShapeDtypeStruct((num_blocks, c_pad, Lw), jnp.float32),
        grid_spec=pltpu.PrefetchScalarGridSpec(
            num_scalar_prefetch=0,
            grid=(num_blocks,),
            in_specs=[
                pl.BlockSpec((1, c_pad, Lw), lambda b: (b, 0, 0)),
                pl.BlockSpec(w_all.shape, lambda b: (0, 0, 0)),
                pl.BlockSpec(bm_all.shape, lambda b: (0, 0, 0)),
                pl.BlockSpec((1, Lw), lambda b: (0, 0)),
            ],
            out_specs=pl.BlockSpec((1, c_pad, Lw), lambda b: (b, 0, 0)),
        ),
        compiler_params=pltpu.CompilerParams(dimension_semantics=("parallel",)),
    )(x_blk, w_all, bm_all, mask_f)

    # wrapper-side: unpack lanes, drop halo + padded channels -> NCHW output
    out = (out_blk.reshape(num_blocks, c_pad, block_n, F)
                  .transpose(0, 2, 1, 3)
                  .reshape(N, c_pad, Hp, Wp)[:, :c_out, 1:1 + H1, 1:1 + W1])
    return out


def ref_forward(x, weights, biases, *, padding_first=0, equalized_lr=True):
    """Pure-JAX (XLA) reference mirroring the PyTorch forward (NCHW)."""
    out = x
    for l, (w, b) in enumerate(zip(weights, biases)):
        co, ci, kh, kw = w.shape
        scale = 1.0 / math.sqrt(ci * kh * kw) if equalized_lr else 1.0
        pad = padding_first if l == 0 else 1
        out = jax.lax.conv_general_dilated(
            out, jnp.asarray(w, jnp.float32) * scale, (1, 1),
            [(pad, pad), (pad, pad)],
            dimension_numbers=("NCHW", "OIHW", "NCHW"),
            precision=jax.lax.Precision.HIGHEST) + b[None, :, None, None]
    return out


if __name__ == "__main__":
    # Destylerv3 defaults: num_layers=5, stride_first=1, padding_first=0
    N, C_IN, C_OUT, H, W = 4, 4, 8, 16, 16
    NUM_LAYERS = 5

    key = jax.random.PRNGKey(0)
    keys = jax.random.split(key, 1 + 2 * NUM_LAYERS)
    x = jax.random.normal(keys[0], (N, C_IN, H, W), jnp.float32)

    weights, biases = [], []
    ci = C_IN
    for l in range(NUM_LAYERS):
        weights.append(jax.random.normal(keys[1 + 2 * l], (C_OUT, ci, 3, 3), jnp.float32))
        biases.append(0.1 * jax.random.normal(keys[2 + 2 * l], (C_OUT,), jnp.float32))
        ci = C_OUT

    out = destylerv3_forward(x, weights, biases, padding_first=0, stride_first=1)
    out = jax.block_until_ready(out)
    assert out.shape == (N, C_OUT, H - 2, W - 2), out.shape

    ref = ref_forward(x, weights, biases, padding_first=0)
    max_err = float(jnp.max(jnp.abs(out - ref)))
    assert max_err < 1e-2, f"max abs err {max_err}"
    print("KERNEL_OK")
</pallas_src>

<mosaic_0001>
module attributes {stable_mosaic.version = 11 : i64} {
  func.func @kernel(%arg0: i32, %arg1: memref<1x8x1024xf32, #tpu.memory_space<vmem>>, %arg2: memref<5x8x72xf32, #tpu.memory_space<vmem>>, %arg3: memref<5x8x1024xf32, #tpu.memory_space<vmem>>, %arg4: memref<1x1024xf32, #tpu.memory_space<vmem>>, %arg5: memref<1x8x1024xf32, #tpu.memory_space<vmem>>) attributes {dimension_semantics = [#tpu.dimension_semantics<parallel>], iteration_bounds = array<i64: 1>, scalar_prefetch = 0 : i64, scratch_operands = 0 : i64, tpu.core_type = #tpu.core_type<tc>, window_params = [{transform_indices = @transform_0, window_bounds = array<i64: 1, 8, 1024>}, {pipeline_mode = #tpu.pipeline_mode<synchronous>, transform_indices = @transform_1, window_bounds = array<i64: 5, 8, 72>}, {pipeline_mode = #tpu.pipeline_mode<synchronous>, transform_indices = @transform_2, window_bounds = array<i64: 5, 8, 1024>}, {pipeline_mode = #tpu.pipeline_mode<synchronous>, transform_indices = @transform_3, window_bounds = array<i64: 1, 1024>}, {transform_indices = @transform_4, window_bounds = array<i64: 1, 8, 1024>}]} {
    %c0 = arith.constant 0 : index
    %c0_0 = arith.constant 0 : index
    %0 = vector.load %arg4[%c0, %c0_0] : memref<1x1024xf32, #tpu.memory_space<vmem>>, vector<1x1024xf32>
    %c0_1 = arith.constant 0 : index
    %c0_2 = arith.constant 0 : index
    %c0_3 = arith.constant 0 : index
    %1 = vector.load %arg1[%c0_1, %c0_2, %c0_3] : memref<1x8x1024xf32, #tpu.memory_space<vmem>>, vector<1x8x1024xf32>
    %2 = vector.shape_cast %1 : vector<1x8x1024xf32> to vector<8x1024xf32>
    %c17_i32 = arith.constant 17 : i32
    %3 = tpu.dynamic_rotate %2 by %c17_i32 dim 1 : vector<8x1024xf32>, i32 -> vector<8x1024xf32>
    %c16_i32 = arith.constant 16 : i32
    %4 = tpu.dynamic_rotate %2 by %c16_i32 dim 1 : vector<8x1024xf32>, i32 -> vector<8x1024xf32>
    %c15_i32 = arith.constant 15 : i32
    %5 = tpu.dynamic_rotate %2 by %c15_i32 dim 1 : vector<8x1024xf32>, i32 -> vector<8x1024xf32>
    %c1_i32 = arith.constant 1 : i32
    %6 = tpu.dynamic_rotate %2 by %c1_i32 dim 1 : vector<8x1024xf32>, i32 -> vector<8x1024xf32>
    %c1023_i32 = arith.constant 1023 : i32
    %7 = tpu.dynamic_rotate %2 by %c1023_i32 dim 1 : vector<8x1024xf32>, i32 -> vector<8x1024xf32>
    %c1009_i32 = arith.constant 1009 : i32
    %8 = tpu.dynamic_rotate %2 by %c1009_i32 dim 1 : vector<8x1024xf32>, i32 -> vector<8x1024xf32>
    %c1008_i32 = arith.constant 1008 : i32
    %9 = tpu.dynamic_rotate %2 by %c1008_i32 dim 1 : vector<8x1024xf32>, i32 -> vector<8x1024xf32>
    %c1007_i32 = arith.constant 1007 : i32
    %10 = tpu.dynamic_rotate %2 by %c1007_i32 dim 1 : vector<8x1024xf32>, i32 -> vector<8x1024xf32>
    %11 = tpu.concatenate %3, %4, %5, %6, %2, %7, %8, %9, %10 in 0 : vector<8x1024xf32>, vector<8x1024xf32>, vector<8x1024xf32>, vector<8x1024xf32>, vector<8x1024xf32>, vector<8x1024xf32>, vector<8x1024xf32>, vector<8x1024xf32>, vector<8x1024xf32> -> vector<72x1024xf32>
    %c0_4 = arith.constant 0 : index
    %c0_5 = arith.constant 0 : index
    %c0_6 = arith.constant 0 : index
    %12 = vector.load %arg2[%c0_4, %c0_5, %c0_6] : memref<5x8x72xf32, #tpu.memory_space<vmem>>, vector<1x8x72xf32>
    %13 = vector.shape_cast %12 : vector<1x8x72xf32> to vector<8x72xf32>
    %cst = arith.constant dense<0.000000e+00> : vector<8x1024xf32>
    %14 = tpu.matmul %13, %11, %cst {dimension_numbers = #tpu.dot_dimension_numbers<[1], [0], [0], [1], [0, 0, 1, 1], [], []>} : vector<8x72xf32>, vector<72x1024xf32>, vector<8x1024xf32> -> vector<8x1024xf32>
    %15 = vector.broadcast %0 : vector<1x1024xf32> to vector<8x1024xf32>
    %16 = arith.mulf %14, %15 : vector<8x1024xf32>
    %c0_7 = arith.constant 0 : index
    %c0_8 = arith.constant 0 : index
    %c0_9 = arith.constant 0 : index
    %17 = vector.load %arg3[%c0_7, %c0_8, %c0_9] : memref<5x8x1024xf32, #tpu.memory_space<vmem>>, vector<1x8x1024xf32>
    %18 = vector.shape_cast %17 : vector<1x8x1024xf32> to vector<8x1024xf32>
    %19 = arith.addf %16, %18 : vector<8x1024xf32>
    %c17_i32_10 = arith.constant 17 : i32
    %20 = tpu.dynamic_rotate %19 by %c17_i32_10 dim 1 : vector<8x1024xf32>, i32 -> vector<8x1024xf32>
    %c16_i32_11 = arith.constant 16 : i32
    %21 = tpu.dynamic_rotate %19 by %c16_i32_11 dim 1 : vector<8x1024xf32>, i32 -> vector<8x1024xf32>
    %c15_i32_12 = arith.constant 15 : i32
    %22 = tpu.dynamic_rotate %19 by %c15_i32_12 dim 1 : vector<8x1024xf32>, i32 -> vector<8x1024xf32>
    %c1_i32_13 = arith.constant 1 : i32
    %23 = tpu.dynamic_rotate %19 by %c1_i32_13 dim 1 : vector<8x1024xf32>, i32 -> vector<8x1024xf32>
    %c1023_i32_14 = arith.constant 1023 : i32
    %24 = tpu.dynamic_rotate %19 by %c1023_i32_14 dim 1 : vector<8x1024xf32>, i32 -> vector<8x1024xf32>
    %c1009_i32_15 = arith.constant 1009 : i32
    %25 = tpu.dynamic_rotate %19 by %c1009_i32_15 dim 1 : vector<8x1024xf32>, i32 -> vector<8x1024xf32>
    %c1008_i32_16 = arith.constant 1008 : i32
    %26 = tpu.dynamic_rotate %19 by %c1008_i32_16 dim 1 : vector<8x1024xf32>, i32 -> vector<8x1024xf32>
    %c1007_i32_17 = arith.constant 1007 : i32
    %27 = tpu.dynamic_rotate %19 by %c1007_i32_17 dim 1 : vector<8x1024xf32>, i32 -> vector<8x1024xf32>
    %28 = tpu.concatenate %20, %21, %22, %23, %19, %24, %25, %26, %27 in 0 : vector<8x1024xf32>, vector<8x1024xf32>, vector<8x1024xf32>, vector<8x1024xf32>, vector<8x1024xf32>, vector<8x1024xf32>, vector<8x1024xf32>, vector<8x1024xf32>, vector<8x1024xf32> -> vector<72x1024xf32>
    %c1 = arith.constant 1 : index
    %c0_18 = arith.constant 0 : index
    %c0_19 = arith.constant 0 : index
    %29 = vector.load %arg2[%c1, %c0_18, %c0_19] : memref<5x8x72xf32, #tpu.memory_space<vmem>>, vector<1x8x72xf32>
    %30 = vector.shape_cast %29 : vector<1x8x72xf32> to vector<8x72xf32>
    %cst_20 = arith.constant dense<0.000000e+00> : vector<8x1024xf32>
    %31 = tpu.matmul %30, %28, %cst_20 {dimension_numbers = #tpu.dot_dimension_numbers<[1], [0], [0], [1], [0, 0, 1, 1], [], []>} : vector<8x72xf32>, vector<72x1024xf32>, vector<8x1024xf32> -> vector<8x1024xf32>
    %32 = vector.broadcast %0 : vector<1x1024xf32> to vector<8x1024xf32>
    %33 = arith.mulf %31, %32 : vector<8x1024xf32>
    %c1_21 = arith.constant 1 : index
    %c0_22 = arith.constant 0 : index
    %c0_23 = arith.constant 0 : index
    %34 = vector.load %arg3[%c1_21, %c0_22, %c0_23] : memref<5x8x1024xf32, #tpu.memory_space<vmem>>, vector<1x8x1024xf32>
    %35 = vector.shape_cast %34 : vector<1x8x1024xf32> to vector<8x1024xf32>
    %36 = arith.addf %33, %35 : vector<8x1024xf32>
    %c17_i32_24 = arith.constant 17 : i32
    %37 = tpu.dynamic_rotate %36 by %c17_i32_24 dim 1 : vector<8x1024xf32>, i32 -> vector<8x1024xf32>
    %c16_i32_25 = arith.constant 16 : i32
    %38 = tpu.dynamic_rotate %36 by %c16_i32_25 dim 1 : vector<8x1024xf32>, i32 -> vector<8x1024xf32>
    %c15_i32_26 = arith.constant 15 : i32
    %39 = tpu.dynamic_rotate %36 by %c15_i32_26 dim 1 : vector<8x1024xf32>, i32 -> vector<8x1024xf32>
    %c1_i32_27 = arith.constant 1 : i32
    %40 = tpu.dynamic_rotate %36 by %c1_i32_27 dim 1 : vector<8x1024xf32>, i32 -> vector<8x1024xf32>
    %c1023_i32_28 = arith.constant 1023 : i32
    %41 = tpu.dynamic_rotate %36 by %c1023_i32_28 dim 1 : vector<8x1024xf32>, i32 -> vector<8x1024xf32>
    %c1009_i32_29 = arith.constant 1009 : i32
    %42 = tpu.dynamic_rotate %36 by %c1009_i32_29 dim 1 : vector<8x1024xf32>, i32 -> vector<8x1024xf32>
    %c1008_i32_30 = arith.constant 1008 : i32
    %43 = tpu.dynamic_rotate %36 by %c1008_i32_30 dim 1 : vector<8x1024xf32>, i32 -> vector<8x1024xf32>
    %c1007_i32_31 = arith.constant 1007 : i32
    %44 = tpu.dynamic_rotate %36 by %c1007_i32_31 dim 1 : vector<8x1024xf32>, i32 -> vector<8x1024xf32>
    %45 = tpu.concatenate %37, %38, %39, %40, %36, %41, %42, %43, %44 in 0 : vector<8x1024xf32>, vector<8x1024xf32>, vector<8x1024xf32>, vector<8x1024xf32>, vector<8x1024xf32>, vector<8x1024xf32>, vector<8x1024xf32>, vector<8x1024xf32>, vector<8x1024xf32> -> vector<72x1024xf32>
    %c2 = arith.constant 2 : index
    %c0_32 = arith.constant 0 : index
    %c0_33 = arith.constant 0 : index
    %46 = vector.load %arg2[%c2, %c0_32, %c0_33] : memref<5x8x72xf32, #tpu.memory_space<vmem>>, vector<1x8x72xf32>
    %47 = vector.shape_cast %46 : vector<1x8x72xf32> to vector<8x72xf32>
    %cst_34 = arith.constant dense<0.000000e+00> : vector<8x1024xf32>
    %48 = tpu.matmul %47, %45, %cst_34 {dimension_numbers = #tpu.dot_dimension_numbers<[1], [0], [0], [1], [0, 0, 1, 1], [], []>} : vector<8x72xf32>, vector<72x1024xf32>, vector<8x1024xf32> -> vector<8x1024xf32>
    %49 = vector.broadcast %0 : vector<1x1024xf32> to vector<8x1024xf32>
    %50 = arith.mulf %48, %49 : vector<8x1024xf32>
    %c2_35 = arith.constant 2 : index
    %c0_36 = arith.constant 0 : index
    %c0_37 = arith.constant 0 : index
    %51 = vector.load %arg3[%c2_35, %c0_36, %c0_37] : memref<5x8x1024xf32, #tpu.memory_space<vmem>>, vector<1x8x1024xf32>
    %52 = vector.shape_cast %51 : vector<1x8x1024xf32> to vector<8x1024xf32>
    %53 = arith.addf %50, %52 : vector<8x1024xf32>
    %c17_i32_38 = arith.constant 17 : i32
    %54 = tpu.dynamic_rotate %53 by %c17_i32_38 dim 1 : vector<8x1024xf32>, i32 -> vector<8x1024xf32>
    %c16_i32_39 = arith.constant 16 : i32
    %55 = tpu.dynamic_rotate %53 by %c16_i32_39 dim 1 : vector<8x1024xf32>, i32 -> vector<8x1024xf32>
    %c15_i32_40 = arith.constant 15 : i32
    %56 = tpu.dynamic_rotate %53 by %c15_i32_40 dim 1 : vector<8x1024xf32>, i32 -> vector<8x1024xf32>
    %c1_i32_41 = arith.constant 1 : i32
    %57 = tpu.dynamic_rotate %53 by %c1_i32_41 dim 1 : vector<8x1024xf32>, i32 -> vector<8x1024xf32>
    %c1023_i32_42 = arith.constant 1023 : i32
    %58 = tpu.dynamic_rotate %53 by %c1023_i32_42 dim 1 : vector<8x1024xf32>, i32 -> vector<8x1024xf32>
    %c1009_i32_43 = arith.constant 1009 : i32
    %59 = tpu.dynamic_rotate %53 by %c1009_i32_43 dim 1 : vector<8x1024xf32>, i32 -> vector<8x1024xf32>
    %c1008_i32_44 = arith.constant 1008 : i32
    %60 = tpu.dynamic_rotate %53 by %c1008_i32_44 dim 1 : vector<8x1024xf32>, i32 -> vector<8x1024xf32>
    %c1007_i32_45 = arith.constant 1007 : i32
    %61 = tpu.dynamic_rotate %53 by %c1007_i32_45 dim 1 : vector<8x1024xf32>, i32 -> vector<8x1024xf32>
    %62 = tpu.concatenate %54, %55, %56, %57, %53, %58, %59, %60, %61 in 0 : vector<8x1024xf32>, vector<8x1024xf32>, vector<8x1024xf32>, vector<8x1024xf32>, vector<8x1024xf32>, vector<8x1024xf32>, vector<8x1024xf32>, vector<8x1024xf32>, vector<8x1024xf32> -> vector<72x1024xf32>
    %c3 = arith.constant 3 : index
    %c0_46 = arith.constant 0 : index
    %c0_47 = arith.constant 0 : index
    %63 = vector.load %arg2[%c3, %c0_46, %c0_47] : memref<5x8x72xf32, #tpu.memory_space<vmem>>, vector<1x8x72xf32>
    %64 = vector.shape_cast %63 : vector<1x8x72xf32> to vector<8x72xf32>
    %cst_48 = arith.constant dense<0.000000e+00> : vector<8x1024xf32>
    %65 = tpu.matmul %64, %62, %cst_48 {dimension_numbers = #tpu.dot_dimension_numbers<[1], [0], [0], [1], [0, 0, 1, 1], [], []>} : vector<8x72xf32>, vector<72x1024xf32>, vector<8x1024xf32> -> vector<8x1024xf32>
    %66 = vector.broadcast %0 : vector<1x1024xf32> to vector<8x1024xf32>
    %67 = arith.mulf %65, %66 : vector<8x1024xf32>
    %c3_49 = arith.constant 3 : index
    %c0_50 = arith.constant 0 : index
    %c0_51 = arith.constant 0 : index
    %68 = vector.load %arg3[%c3_49, %c0_50, %c0_51] : memref<5x8x1024xf32, #tpu.memory_space<vmem>>, vector<1x8x1024xf32>
    %69 = vector.shape_cast %68 : vector<1x8x1024xf32> to vector<8x1024xf32>
    %70 = arith.addf %67, %69 : vector<8x1024xf32>
    %c17_i32_52 = arith.constant 17 : i32
    %71 = tpu.dynamic_rotate %70 by %c17_i32_52 dim 1 : vector<8x1024xf32>, i32 -> vector<8x1024xf32>
    %c16_i32_53 = arith.constant 16 : i32
    %72 = tpu.dynamic_rotate %70 by %c16_i32_53 dim 1 : vector<8x1024xf32>, i32 -> vector<8x1024xf32>
    %c15_i32_54 = arith.constant 15 : i32
    %73 = tpu.dynamic_rotate %70 by %c15_i32_54 dim 1 : vector<8x1024xf32>, i32 -> vector<8x1024xf32>
    %c1_i32_55 = arith.constant 1 : i32
    %74 = tpu.dynamic_rotate %70 by %c1_i32_55 dim 1 : vector<8x1024xf32>, i32 -> vector<8x1024xf32>
    %c1023_i32_56 = arith.constant 1023 : i32
    %75 = tpu.dynamic_rotate %70 by %c1023_i32_56 dim 1 : vector<8x1024xf32>, i32 -> vector<8x1024xf32>
    %c1009_i32_57 = arith.constant 1009 : i32
    %76 = tpu.dynamic_rotate %70 by %c1009_i32_57 dim 1 : vector<8x1024xf32>, i32 -> vector<8x1024xf32>
    %c1008_i32_58 = arith.constant 1008 : i32
    %77 = tpu.dynamic_rotate %70 by %c1008_i32_58 dim 1 : vector<8x1024xf32>, i32 -> vector<8x1024xf32>
    %c1007_i32_59 = arith.constant 1007 : i32
    %78 = tpu.dynamic_rotate %70 by %c1007_i32_59 dim 1 : vector<8x1024xf32>, i32 -> vector<8x1024xf32>
    %79 = tpu.concatenate %71, %72, %73, %74, %70, %75, %76, %77, %78 in 0 : vector<8x1024xf32>, vector<8x1024xf32>, vector<8x1024xf32>, vector<8x1024xf32>, vector<8x1024xf32>, vector<8x1024xf32>, vector<8x1024xf32>, vector<8x1024xf32>, vector<8x1024xf32> -> vector<72x1024xf32>
    %c4 = arith.constant 4 : index
    %c0_60 = arith.constant 0 : index
    %c0_61 = arith.constant 0 : index
    %80 = vector.load %arg2[%c4, %c0_60, %c0_61] : memref<5x8x72xf32, #tpu.memory_space<vmem>>, vector<1x8x72xf32>
    %81 = vector.shape_cast %80 : vector<1x8x72xf32> to vector<8x72xf32>
    %cst_62 = arith.constant dense<0.000000e+00> : vector<8x1024xf32>
    %82 = tpu.matmul %81, %79, %cst_62 {dimension_numbers = #tpu.dot_dimension_numbers<[1], [0], [0], [1], [0, 0, 1, 1], [], []>} : vector<8x72xf32>, vector<72x1024xf32>, vector<8x1024xf32> -> vector<8x1024xf32>
    %83 = vector.broadcast %0 : vector<1x1024xf32> to vector<8x1024xf32>
    %84 = arith.mulf %82, %83 : vector<8x1024xf32>
    %c4_63 = arith.constant 4 : index
    %c0_64 = arith.constant 0 : index
    %c0_65 = arith.constant 0 : index
    %85 = vector.load %arg3[%c4_63, %c0_64, %c0_65] : memref<5x8x1024xf32, #tpu.memory_space<vmem>>, vector<1x8x1024xf32>
    %86 = vector.shape_cast %85 : vector<1x8x1024xf32> to vector<8x1024xf32>
    %87 = arith.addf %84, %86 : vector<8x1024xf32>
    %c0_66 = arith.constant 0 : index
    %c0_67 = arith.constant 0 : index
    %c0_68 = arith.constant 0 : index
    %88 = vector.load %arg5[%c0_66, %c0_67, %c0_68] : memref<1x8x1024xf32, #tpu.memory_space<vmem>>, vector<1x8x1024xf32>
    %89 = vector.shape_cast %88 : vector<1x8x1024xf32> to vector<8x1024xf32>
    %90 = vector.shape_cast %87 : vector<8x1024xf32> to vector<1x8x1024xf32>
    tpu.vector_store %arg5[%c0_66, %c0_67, %c0_68], %90 {strides = array<i32>} : memref<1x8x1024xf32, #tpu.memory_space<vmem>>, vector<1x8x1024xf32>,
    return
  }
  func.func @transform_0(%arg0: i32) -> (i32, i32, i32) {
    %c0_i32 = arith.constant 0 : i32
    %c0_i32_0 = arith.constant 0 : i32
    %c0_i32_1 = arith.constant 0 : i32
    return %arg0, %c0_i32, %c0_i32_0 : i32, i32, i32
  }
  func.func @transform_1(%arg0: i32) -> (i32, i32, i32) {
    %c0_i32 = arith.constant 0 : i32
    %c0_i32_0 = arith.constant 0 : i32
    %c0_i32_1 = arith.constant 0 : i32
    %c0_i32_2 = arith.constant 0 : i32
    return %c0_i32, %c0_i32_0, %c0_i32_1 : i32, i32, i32
  }
  func.func @transform_2(%arg0: i32) -> (i32, i32, i32) {
    %c0_i32 = arith.constant 0 : i32
    %c0_i32_0 = arith.constant 0 : i32
    %c0_i32_1 = arith.constant 0 : i32
    %c0_i32_2 = arith.constant 0 : i32
    return %c0_i32, %c0_i32_0, %c0_i32_1 : i32, i32, i32
  }
  func.func @transform_3(%arg0: i32) -> (i32, i32) {
    %c0_i32 = arith.constant 0 : i32
    %c0_i32_0 = arith.constant 0 : i32
    %c0_i32_1 = arith.constant 0 : i32
    return %c0_i32, %c0_i32_0 : i32, i32
  }
  func.func @transform_4(%arg0: i32) -> (i32, i32, i32) {
    %c0_i32 = arith.constant 0 : i32
    %c0_i32_0 = arith.constant 0 : i32
    %c0_i32_1 = arith.constant 0 : i32
    return %arg0, %c0_i32, %c0_i32_0 : i32, i32, i32
  }
}

</mosaic_0001>

<llo_original>
// kernel: tpu_custom_call.1
$region0: #{tpu_custom_call.1}
  #allocation0 [shape = 'u32[]', space=smem, size = 0x4, offset = 0x4, fixed_abs, tag = 'smem constant byte address 0x4 - core index']
  #allocation1 [shape = 'u32[72,128]{1,0:T(1,128)}', space=vmem, size = 0x9000, scoped, tag = 'internal scratch']
  %s0 = inlined_call_operand.hbm [shape: f32[1,8,1024], index: 0, kind: input, shape index: {}]
  %s1 = inlined_call_operand.hbm [shape: f32[5,8,72], index: 1, kind: input, shape index: {}]
  %s2 = inlined_call_operand.hbm [shape: f32[5,8,1024], index: 2, kind: input, shape index: {}]
  %s3 = inlined_call_operand.hbm [shape: f32[1,1024], index: 3, kind: input, shape index: {}]
  %s4 = inlined_call_operand.hbm [shape: f32[1,8,1024], index: 4, kind: output, shape index: {}]
  %s5 = sld [smem:[#allocation0]]
  $region42: #{tpu_custom_call.1} parent=0
    _
  %s7 = ssub.s32 1, %s5
  %s8 = scalar_select 0, %s7, %s5
  $region1: #{tpu_custom_call.1} parent=0
    #allocation2 [shape = 'u8[32768]{0}', space=vmem, size = 0x8000, scoped, tag = 'input window, operand 0, single buffered']
    #allocation3 [shape = 's32[1]{0}', space=sflag, size = 0x4, scoped, tag = 'scoped memory for tpu_custom_call.1']
    #allocation4 [shape = 's32[1]{0}', space=sflag, size = 0x4, scoped, tag = 'scoped memory for tpu_custom_call.1']
    #allocation5 [shape = 'u8[20480]{0}', space=vmem, size = 0x5000, scoped, tag = 'input window, operand 1, single buffered']
    #allocation6 [shape = 's32[1]{0}', space=sflag, size = 0x4, scoped, tag = 'scoped memory for tpu_custom_call.1']
    #allocation7 [shape = 'u8[163840]{0}', space=vmem, size = 0x28000, scoped, tag = 'input window, operand 2, single buffered']
    #allocation8 [shape = 'u8[4096]{0}', space=vmem, size = 0x1000, scoped, tag = 'input window, operand 3, single buffered']
    #allocation9 [shape = 's32[1]{0}', space=sflag, size = 0x4, scoped, tag = 'scoped memory for tpu_custom_call.1']
    #allocation10 [shape = 'u8[32768]{0}', space=vmem, size = 0x8000, scoped, tag = 'output window, operand 0, single buffered']
    %9 = vsyncpa [#allocation3], 0
    %10 = vsyncpa [#allocation6], 0
    %11 = vsyncpa [#allocation9], 0
    %12 = vsyncpa [#allocation4], 0
    // Predicated region
    $region2: #{tpu_custom_call.1} parent=1 // pred_check
      _
    $region3: #{tpu_custom_call.1} parent=1 // pred_check_branch
      %14 = sbr.rel (0) target = $region5
    $region4: #{tpu_custom_call.1} parent=1 // pred_region
      %16 = vsyncadd [#allocation3], 0
      %s18 = sshll.u32 %s0, 4
      %s19 = int_to_ptr.hbm [resolvable:$true] %s18
      %s20 = sshll.u32 [#allocation2], 4
      %s21 = int_to_ptr.vmem [resolvable:$true] %s20
      %23 = dma.hbm_to_vmem [thread:$0]  %s19, 1024, %s21, [#allocation3]
    $region5: #{tpu_custom_call.1} parent=1 // pred_fallthru
      _
    // Predicated region
    $region6: #{tpu_custom_call.1} parent=1 // pred_check
      _
    $region7: #{tpu_custom_call.1} parent=1 // pred_check_branch
      %25 = sbr.rel (0) target = $region9
    $region8: #{tpu_custom_call.1} parent=1 // pred_region
      %27 = vsyncadd [#allocation6], 0
      %s28 = sshll.u32 %s1, 4
      %s29 = int_to_ptr.hbm [resolvable:$true] %s28
      %s30 = sshll.u32 [#allocation5], 4
      %s31 = int_to_ptr.vmem [resolvable:$true] %s30
      %36 = dma.hbm_to_vmem [thread:$0]  %s29, 640, %s31, [#allocation6], 128, 128, 8
    $region9: #{tpu_custom_call.1} parent=1 // pred_fallthru
      _
    // Predicated region
    $region10: #{tpu_custom_call.1} parent=1 // pred_check
      _
    $region11: #{tpu_custom_call.1} parent=1 // pred_check_branch
      %38 = sbr.rel (0) target = $region13
    $region12: #{tpu_custom_call.1} parent=1 // pred_region
      %40 = vsyncadd [#allocation6], 0
      %s41 = sshll.u32 %s2, 4
      %s42 = int_to_ptr.hbm [resolvable:$true] %s41
      %s43 = sshll.u32 [#allocation7], 4
      %s44 = int_to_ptr.vmem [resolvable:$true] %s43
      %49 = dma.hbm_to_vmem [thread:$0]  %s42, 5120, %s44, [#allocation6], 1024, 1024, 64
    $region13: #{tpu_custom_call.1} parent=1 // pred_fallthru
      _
    // Predicated region
    $region14: #{tpu_custom_call.1} parent=1 // pred_check
      _
    $region15: #{tpu_custom_call.1} parent=1 // pred_check_branch
      %51 = sbr.rel (0) target = $region17
    $region16: #{tpu_custom_call.1} parent=1 // pred_region
      %53 = vsyncadd [#allocation9], 0
      %s55 = sshll.u32 %s3, 4
      %s56 = int_to_ptr.hbm [resolvable:$true] %s55
      %s57 = sshll.u32 [#allocation8], 4
      %s58 = int_to_ptr.vmem [resolvable:$true] %s57
      %60 = dma.hbm_to_vmem [thread:$0]  %s56, 128, %s58, [#allocation9]
    $region17: #{tpu_custom_call.1} parent=1 // pred_fallthru
      _
    // Predicated region
    $region18: #{tpu_custom_call.1} parent=1 // pred_check
      _
    $region19: #{tpu_custom_call.1} parent=1 // pred_check_branch
      %62 = sbr.rel (0) target = $region21
    $region20: #{tpu_custom_call.1} parent=1 // pred_region
      %64 = dma.done [#allocation3], 1024
    $region21: #{tpu_custom_call.1} parent=1 // pred_fallthru
      _
    // Predicated region
    $region22: #{tpu_custom_call.1} parent=1 // pred_check
      _
    $region23: #{tpu_custom_call.1} parent=1 // pred_check_branch
      %66 = sbr.rel (0) target = $region25
    $region24: #{tpu_custom_call.1} parent=1 // pred_region
      %68 = dma.done [#allocation6], 640
    $region25: #{tpu_custom_call.1} parent=1 // pred_fallthru
      _
    // Predicated region
    $region26: #{tpu_custom_call.1} parent=1 // pred_check
      _
    $region27: #{tpu_custom_call.1} parent=1 // pred_check_branch
      %70 = sbr.rel (0) target = $region29
    $region28: #{tpu_custom_call.1} parent=1 // pred_region
      %72 = dma.done [#allocation6], 5120
    $region29: #{tpu_custom_call.1} parent=1 // pred_fallthru
      _
    // Predicated region
    $region30: #{tpu_custom_call.1} parent=1 // pred_check
      _
    $region31: #{tpu_custom_call.1} parent=1 // pred_check_branch
      %74 = sbr.rel (0) target = $region33
    $region32: #{tpu_custom_call.1} parent=1 // pred_region
      %76 = dma.done [#allocation9], 128
    $region33: #{tpu_custom_call.1} parent=1 // pred_fallthru
      _
    %v77 = vld [vmem:[#allocation8] sm:$0xff]
    %v78 = vld [vmem:[#allocation2] sm:$0xff]
    %v79 = vld [vmem:[#allocation2 + $0x8] sm:$0xff]
    %v80 = vld [vmem:[#allocation2 + $0x10] sm:$0xff]
    %v81 = vld [vmem:[#allocation2 + $0x18] sm:$0xff]
    %v82 = vld [vmem:[#allocation2 + $0x20] sm:$0xff]
    %v83 = vld [vmem:[#allocation2 + $0x28] sm:$0xff]
    %v84 = vld [vmem:[#allocation2 + $0x30] sm:$0xff]
    %v85 = vld [vmem:[#allocation2 + $0x38] sm:$0xff]
    %86 = vrot.lane.b32.xlu0 %v78, 17
    %v87 = vpop.permute.xlu0 %86
    %88 = vrot.lane.b32.xlu0 %v79, 17
    %v89 = vpop.permute.xlu0 %88
    %90 = vrot.lane.b32.xlu0 %v80, 17
    %v91 = vpop.permute.xlu0 %90
    %92 = vrot.lane.b32.xlu0 %v81, 17
    %v93 = vpop.permute.xlu0 %92
    %94 = vrot.lane.b32.xlu0 %v82, 17
    %v95 = vpop.permute.xlu0 %94
    %96 = vrot.lane.b32.xlu0 %v83, 17
    %v97 = vpop.permute.xlu0 %96
    %98 = vrot.lane.b32.xlu0 %v84, 17
    %v99 = vpop.permute.xlu0 %98
    %100 = vrot.lane.b32.xlu0 %v85, 17
    %v101 = vpop.permute.xlu0 %100
    %v102 = vlaneseq
    %v103 = vand.u32 %v102, 127
    %vm104 = vcmp.lt.s32.totalorder %v103, 17
    %v105 = vsel %vm104, %v99, %v101
    %v106 = vsel %vm104, %v97, %v99
    %v107 = vsel %vm104, %v95, %v97
    %v108 = vsel %vm104, %v93, %v95
    %v109 = vsel %vm104, %v91, %v93
    %v110 = vsel %vm104, %v89, %v91
    %v111 = vsel %vm104, %v87, %v89
    %v112 = vsel %vm104, %v101, %v87
    %113 = vrot.lane.b32.xlu0 %v78, 16
    %v114 = vpop.permute.xlu0 %113
    %115 = vrot.lane.b32.xlu0 %v79, 16
    %v116 = vpop.permute.xlu0 %115
    %117 = vrot.lane.b32.xlu0 %v80, 16
    %v118 = vpop.permute.xlu0 %117
    %119 = vrot.lane.b32.xlu0 %v81, 16
    %v120 = vpop.permute.xlu0 %119
    %121 = vrot.lane.b32.xlu0 %v82, 16
    %v122 = vpop.permute.xlu0 %121
    %123 = vrot.lane.b32.xlu0 %v83, 16
    %v124 = vpop.permute.xlu0 %123
    %125 = vrot.lane.b32.xlu0 %v84, 16
    %v126 = vpop.permute.xlu0 %125
    %127 = vrot.lane.b32.xlu0 %v85, 16
    %v128 = vpop.permute.xlu0 %127
    %vm129 = vcmp.lt.s32.totalorder %v103, 16
    %v130 = vsel %vm129, %v126, %v128
    %v131 = vsel %vm129, %v124, %v126
    %v132 = vsel %vm129, %v122, %v124
    %v133 = vsel %vm129, %v120, %v122
    %v134 = vsel %vm129, %v118, %v120
    %v135 = vsel %vm129, %v116, %v118
    %v136 = vsel %vm129, %v114, %v116
    %v137 = vsel %vm129, %v128, %v114
    %138 = vrot.lane.b32.xlu0 %v78, 15
    %v139 = vpop.permute.xlu0 %138
    %140 = vrot.lane.b32.xlu0 %v79, 15
    %v141 = vpop.permute.xlu0 %140
    %142 = vrot.lane.b32.xlu0 %v80, 15
    %v143 = vpop.permute.xlu0 %142
    %144 = vrot.lane.b32.xlu0 %v81, 15
    %v145 = vpop.permute.xlu0 %144
    %146 = vrot.lane.b32.xlu0 %v82, 15
    %v147 = vpop.permute.xlu0 %146
    %148 = vrot.lane.b32.xlu0 %v83, 15
    %v149 = vpop.permute.xlu0 %148
    %150 = vrot.lane.b32.xlu0 %v84, 15
    %v151 = vpop.permute.xlu0 %150
    %152 = vrot.lane.b32.xlu0 %v85, 15
    %v153 = vpop.permute.xlu0 %152
    %vm154 = vcmp.lt.s32.totalorder %v103, 15
    %v155 = vsel %vm154, %v151, %v153
    %v156 = vsel %vm154, %v149, %v151
    %v157 = vsel %vm154, %v147, %v149
    %v158 = vsel %vm154, %v145, %v147
    %v159 = vsel %vm154, %v143, %v145
    %v160 = vsel %vm154, %v141, %v143
    %v161 = vsel %vm154, %v139, %v141
    %v162 = vsel %vm154, %v153, %v139
    %163 = vrot.lane.b32.xlu0 %v78, 1
    %v164 = vpop.permute.xlu0 %163
    %165 = vrot.lane.b32.xlu0 %v79, 1
    %v166 = vpop.permute.xlu0 %165
    %167 = vrot.lane.b32.xlu0 %v80, 1
    %v168 = vpop.permute.xlu0 %167
    %169 = vrot.lane.b32.xlu0 %v81, 1
    %v170 = vpop.permute.xlu0 %169
    %171 = vrot.lane.b32.xlu0 %v82, 1
    %v172 = vpop.permute.xlu0 %171
    %173 = vrot.lane.b32.xlu0 %v83, 1
    %v174 = vpop.permute.xlu0 %173
    %175 = vrot.lane.b32.xlu0 %v84, 1
    %v176 = vpop.permute.xlu0 %175
    %177 = vrot.lane.b32.xlu0 %v85, 1
    %v178 = vpop.permute.xlu0 %177
    %vm179 = vcmp.lt.s32.totalorder %v103, 1
    %v180 = vsel %vm179, %v176, %v178
    %v181 = vsel %vm179, %v174, %v176
    %v182 = vsel %vm179, %v172, %v174
    %v183 = vsel %vm179, %v170, %v172
    %v184 = vsel %vm179, %v168, %v170
    %v185 = vsel %vm179, %v166, %v168
    %v186 = vsel %vm179, %v164, %v166
    %v187 = vsel %vm179, %v178, %v164
    %188 = vrot.lane.b32.xlu0 %v78, 127
    %v189 = vpop.permute.xlu0 %188
    %190 = vrot.lane.b32.xlu0 %v79, 127
    %v191 = vpop.permute.xlu0 %190
    %192 = vrot.lane.b32.xlu0 %v80, 127
    %v193 = vpop.permute.xlu0 %192
    %194 = vrot.lane.b32.xlu0 %v81, 127
    %v195 = vpop.permute.xlu0 %194
    %196 = vrot.lane.b32.xlu0 %v82, 127
    %v197 = vpop.permute.xlu0 %196
    %198 = vrot.lane.b32.xlu0 %v83, 127
    %v199 = vpop.permute.xlu0 %198
    %200 = vrot.lane.b32.xlu0 %v84, 127
    %v201 = vpop.permute.xlu0 %200
    %202 = vrot.lane.b32.xlu0 %v85, 127
    %v203 = vpop.permute.xlu0 %202
    %vm204 = vcmp.lt.s32.totalorder %v103, 127
    %v205 = vsel %vm204, %v201, %v203
    %v206 = vsel %vm204, %v199, %v201
    %v207 = vsel %vm204, %v197, %v199
    %v208 = vsel %vm204, %v195, %v197
    %v209 = vsel %vm204, %v193, %v195
    %v210 = vsel %vm204, %v191, %v193
    %v211 = vsel %vm204, %v189, %v191
    %v212 = vsel %vm204, %v203, %v189
    %213 = vrot.lane.b32.xlu0 %v78, 113
    %v214 = vpop.permute.xlu0 %213
    %215 = vrot.lane.b32.xlu0 %v79, 113
    %v216 = vpop.permute.xlu0 %215
    %217 = vrot.lane.b32.xlu0 %v80, 113
    %v218 = vpop.permute.xlu0 %217
    %219 = vrot.lane.b32.xlu0 %v81, 113
    %v220 = vpop.permute.xlu0 %219
    %221 = vrot.lane.b32.xlu0 %v82, 113
    %v222 = vpop.permute.xlu0 %221
    %223 = vrot.lane.b32.xlu0 %v83, 113
    %v224 = vpop.permute.xlu0 %223
    %225 = vrot.lane.b32.xlu0 %v84, 113
    %v226 = vpop.permute.xlu0 %225
    %227 = vrot.lane.b32.xlu0 %v85, 113
    %v228 = vpop.permute.xlu0 %227
    %vm229 = vcmp.lt.s32.totalorder %v103, 113
    %v230 = vsel %vm229, %v226, %v228
    %v231 = vsel %vm229, %v224, %v226
    %v232 = vsel %vm229, %v222, %v224
    %v233 = vsel %vm229, %v220, %v222
    %v234 = vsel %vm229, %v218, %v220
    %v235 = vsel %vm229, %v216, %v218
    %v236 = vsel %vm229, %v214, %v216
    %v237 = vsel %vm229, %v228, %v214
    %238 = vrot.lane.b32.xlu0 %v78, 112
    %v239 = vpop.permute.xlu0 %238
    %240 = vrot.lane.b32.xlu0 %v79, 112
    %v241 = vpop.permute.xlu0 %240
    %242 = vrot.lane.b32.xlu0 %v80, 112
    %v243 = vpop.permute.xlu0 %242
    %244 = vrot.lane.b32.xlu0 %v81, 112
    %v245 = vpop.permute.xlu0 %244
    %246 = vrot.lane.b32.xlu0 %v82, 112
    %v247 = vpop.permute.xlu0 %246
    %248 = vrot.lane.b32.xlu0 %v83, 112
    %v249 = vpop.permute.xlu0 %248
    %250 = vrot.lane.b32.xlu0 %v84, 112
    %v251 = vpop.permute.xlu0 %250
    %252 = vrot.lane.b32.xlu0 %v85, 112
    %v253 = vpop.permute.xlu0 %252
    %vm254 = vcmp.lt.s32.totalorder %v103, 112
    %v255 = vsel %vm254, %v251, %v253
    %v256 = vsel %vm254, %v249, %v251
    %v257 = vsel %vm254, %v247, %v249
    %v258 = vsel %vm254, %v245, %v247
    %v259 = vsel %vm254, %v243, %v245
    %v260 = vsel %vm254, %v241, %v243
    %v261 = vsel %vm254, %v239, %v241
    %v262 = vsel %vm254, %v253, %v239
    %263 = vrot.lane.b32.xlu0 %v78, 111
    %v264 = vpop.permute.xlu0 %263
    %265 = vrot.lane.b32.xlu0 %v79, 111
    %v266 = vpop.permute.xlu0 %265
    %267 = vrot.lane.b32.xlu0 %v80, 111
    %v268 = vpop.permute.xlu0 %267
    %269 = vrot.lane.b32.xlu0 %v81, 111
    %v270 = vpop.permute.xlu0 %269
    %271 = vrot.lane.b32.xlu0 %v82, 111
    %v272 = vpop.permute.xlu0 %271
    %273 = vrot.lane.b32.xlu0 %v83, 111
    %v274 = vpop.permute.xlu0 %273
    %275 = vrot.lane.b32.xlu0 %v84, 111
    %v276 = vpop.permute.xlu0 %275
    %277 = vrot.lane.b32.xlu0 %v85, 111
    %v278 = vpop.permute.xlu0 %277
    %vm279 = vcmp.lt.s32.totalorder %v103, 111
    %v280 = vsel %vm279, %v276, %v278
    %v281 = vsel %vm279, %v274, %v276
    %v282 = vsel %vm279, %v272, %v274
    %v283 = vsel %vm279, %v270, %v272
    %v284 = vsel %vm279, %v268, %v270
    %v285 = vsel %vm279, %v266, %v268
    %v286 = vsel %vm279, %v264, %v266
    %v287 = vsel %vm279, %v278, %v264
    %v288 = vld [vmem:[#allocation5] sm:$0xff]
    %vm289 = vcmask 588800
    %v291 = vsel %vm289, %v288, 0
    %293 = vmatpush.msra.mxu0 0.0
    %294 = vmatpush.msra.mxu0 0.0
    %295 = vmatpush.msra.mxu0 0.0
    %296 = vmatpush.msra.mxu0 0.0
    %297 = vmatpush.msra.mxu0 0.0
    %298 = vmatpush.msra.mxu0 0.0
    %299 = vmatpush.msra.mxu0 0.0
    %300 = vmatpush.msra.mxu0 %v286
    %301 = vmatpush.msra.mxu0 %v261
    %302 = vmatpush.msra.mxu0 %v236
    %303 = vmatpush.msra.mxu0 %v211
    %304 = vmatpush.msra.mxu0 %v78
    %305 = vmatpush.msra.mxu0 %v187
    %306 = vmatpush.msra.mxu0 %v162
    %307 = vmatpush.msra.mxu0 %v137
    %308 = vmatpush.msra.mxu0 %v112
    %309 = vmatmul.f32.gmra.mxu0 %v291
    %v310 = vpop.f32.mrf.mxu0
    %v311 = vadd.f32 0.0, %v310
    %312 = vdwg.mxu0
    %313 = vmatpush.msra.mxu0 0.0
    %314 = vmatpush.msra.mxu0 0.0
    %315 = vmatpush.msra.mxu0 0.0
    %316 = vmatpush.msra.mxu0 0.0
    %317 = vmatpush.msra.mxu0 0.0
    %318 = vmatpush.msra.mxu0 0.0
    %319 = vmatpush.msra.mxu0 0.0
    %320 = vmatpush.msra.mxu0 %v285
    %321 = vmatpush.msra.mxu0 %v260
    %322 = vmatpush.msra.mxu0 %v235
    %323 = vmatpush.msra.mxu0 %v210
    %324 = vmatpush.msra.mxu0 %v79
    %325 = vmatpush.msra.mxu0 %v186
    %326 = vmatpush.msra.mxu0 %v161
    %327 = vmatpush.msra.mxu0 %v136
    %328 = vmatpush.msra.mxu0 %v111
    %329 = vmatmul.f32.gmra.mxu0 %v291
    %v330 = vpop.f32.mrf.mxu0
    %v331 = vadd.f32 0.0, %v330
    %332 = vdwg.mxu0
    %333 = vmatpush.msra.mxu0 0.0
    %334 = vmatpush.msra.mxu0 0.0
    %335 = vmatpush.msra.mxu0 0.0
    %336 = vmatpush.msra.mxu0 0.0
    %337 = vmatpush.msra.mxu0 0.0
    %338 = vmatpush.msra.mxu0 0.0
    %339 = vmatpush.msra.mxu0 0.0
    %340 = vmatpush.msra.mxu0 %v284
    %341 = vmatpush.msra.mxu0 %v259
    %342 = vmatpush.msra.mxu0 %v234
    %343 = vmatpush.msra.mxu0 %v209
    %344 = vmatpush.msra.mxu0 %v80
    %345 = vmatpush.msra.mxu0 %v185
    %346 = vmatpush.msra.mxu0 %v160
    %347 = vmatpush.msra.mxu0 %v135
    %348 = vmatpush.msra.mxu0 %v110
    %349 = vmatmul.f32.gmra.mxu0 %v291
    %v350 = vpop.f32.mrf.mxu0
    %v351 = vadd.f32 0.0, %v350
    %352 = vdwg.mxu0
    %353 = vmatpush.msra.mxu0 0.0
    %354 = vmatpush.msra.mxu0 0.0
    %355 = vmatpush.msra.mxu0 0.0
    %356 = vmatpush.msra.mxu0 0.0
    %357 = vmatpush.msra.mxu0 0.0
    %358 = vmatpush.msra.mxu0 0.0
    %359 = vmatpush.msra.mxu0 0.0
    %360 = vmatpush.msra.mxu0 %v283
    %361 = vmatpush.msra.mxu0 %v258
    %362 = vmatpush.msra.mxu0 %v233
    %363 = vmatpush.msra.mxu0 %v208
    %364 = vmatpush.msra.mxu0 %v81
    %365 = vmatpush.msra.mxu0 %v184
    %366 = vmatpush.msra.mxu0 %v159
    %367 = vmatpush.msra.mxu0 %v134
    %368 = vmatpush.msra.mxu0 %v109
    %369 = vmatmul.f32.gmra.mxu0 %v291
    %v370 = vpop.f32.mrf.mxu0
    %v371 = vadd.f32 0.0, %v370
    %372 = vdwg.mxu0
    %373 = vmatpush.msra.mxu0 0.0
    %374 = vmatpush.msra.mxu0 0.0
    %375 = vmatpush.msra.mxu0 0.0
    %376 = vmatpush.msra.mxu0 0.0
    %377 = vmatpush.msra.mxu0 0.0
    %378 = vmatpush.msra.mxu0 0.0
    %379 = vmatpush.msra.mxu0 0.0
    %380 = vmatpush.msra.mxu0 %v282
    %381 = vmatpush.msra.mxu0 %v257
    %382 = vmatpush.msra.mxu0 %v232
    %383 = vmatpush.msra.mxu0 %v207
    %384 = vmatpush.msra.mxu0 %v82
    %385 = vmatpush.msra.mxu0 %v183
    %386 = vmatpush.msra.mxu0 %v158
    %387 = vmatpush.msra.mxu0 %v133
    %388 = vmatpush.msra.mxu0 %v108
    %389 = vmatmul.f32.gmra.mxu0 %v291
    %v390 = vpop.f32.mrf.mxu0
    %v391 = vadd.f32 0.0, %v390
    %392 = vdwg.mxu0
    %393 = vmatpush.msra.mxu0 0.0
    %394 = vmatpush.msra.mxu0 0.0
    %395 = vmatpush.msra.mxu0 0.0
    %396 = vmatpush.msra.mxu0 0.0
    %397 = vmatpush.msra.mxu0 0.0
    %398 = vmatpush.msra.mxu0 0.0
    %399 = vmatpush.msra.mxu0 0.0
    %400 = vmatpush.msra.mxu0 %v281
    %401 = vmatpush.msra.mxu0 %v256
    %402 = vmatpush.msra.mxu0 %v231
    %403 = vmatpush.msra.mxu0 %v206
    %404 = vmatpush.msra.mxu0 %v83
    %405 = vmatpush.msra.mxu0 %v182
    %406 = vmatpush.msra.mxu0 %v157
    %407 = vmatpush.msra.mxu0 %v132
    %408 = vmatpush.msra.mxu0 %v107
    %409 = vmatmul.f32.gmra.mxu0 %v291
    %v410 = vpop.f32.mrf.mxu0
    %v411 = vadd.f32 0.0, %v410
    %412 = vdwg.mxu0
    %413 = vmatpush.msra.mxu0 0.0
    %414 = vmatpush.msra.mxu0 0.0
    %415 = vmatpush.msra.mxu0 0.0
    %416 = vmatpush.msra.mxu0 0.0
    %417 = vmatpush.msra.mxu0 0.0
    %418 = vmatpush.msra.mxu0 0.0
    %419 = vmatpush.msra.mxu0 0.0
    %420 = vmatpush.msra.mxu0 %v280
    %421 = vmatpush.msra.mxu0 %v255
    %422 = vmatpush.msra.mxu0 %v230
    %423 = vmatpush.msra.mxu0 %v205
    %424 = vmatpush.msra.mxu0 %v84
    %425 = vmatpush.msra.mxu0 %v181
    %426 = vmatpush.msra.mxu0 %v156
    %427 = vmatpush.msra.mxu0 %v131
    %428 = vmatpush.msra.mxu0 %v106
    %429 = vmatmul.f32.gmra.mxu0 %v291
    %v430 = vpop.f32.mrf.mxu0
    %v431 = vadd.f32 0.0, %v430
    %432 = vdwg.mxu0
    %433 = vmatpush.msra.mxu0 0.0
    %434 = vmatpush.msra.mxu0 0.0
    %435 = vmatpush.msra.mxu0 0.0
    %436 = vmatpush.msra.mxu0 0.0
    %437 = vmatpush.msra.mxu0 0.0
    %438 = vmatpush.msra.mxu0 0.0
    %439 = vmatpush.msra.mxu0 0.0
    %440 = vmatpush.msra.mxu0 %v287
    %441 = vmatpush.msra.mxu0 %v262
    %442 = vmatpush.msra.mxu0 %v237
    %443 = vmatpush.msra.mxu0 %v212
    %444 = vmatpush.msra.mxu0 %v85
    %445 = vmatpush.msra.mxu0 %v180
    %446 = vmatpush.msra.mxu0 %v155
    %447 = vmatpush.msra.mxu0 %v130
    %448 = vmatpush.msra.mxu0 %v105
    %449 = vmatmul.f32.gmra.mxu0 %v291
    %v450 = vpop.f32.mrf.mxu0
    %v451 = vadd.f32 0.0, %v450
    %452 = vdwg.mxu0
    %v454 = vperm.slane %v77, 0
    %v455 = vperm.slane %v77, 1
    %v456 = vperm.slane %v77, 2
    %v457 = vperm.slane %v77, 3
    %v458 = vperm.slane %v77, 4
    %v459 = vperm.slane %v77, 5
    %v460 = vperm.slane %v77, 6
    %v461 = vperm.slane %v77, 7
    %v470 = vmul.f32 %v311, %v454
    %v471 = vmul.f32 %v331, %v455
    %v472 = vmul.f32 %v351, %v456
    %v473 = vmul.f32 %v371, %v457
    %v474 = vmul.f32 %v391, %v458
    %v475 = vmul.f32 %v411, %v459
    %v476 = vmul.f32 %v431, %v460
    %v477 = vmul.f32 %v451, %v461
    %v478 = vld [vmem:[#allocation7] sm:$0xff]
    %v479 = vld [vmem:[#allocation7 + $0x8] sm:$0xff]
    %v480 = vld [vmem:[#allocation7 + $0x10] sm:$0xff]
    %v481 = vld [vmem:[#allocation7 + $0x18] sm:$0xff]
    %v482 = vld [vmem:[#allocation7 + $0x20] sm:$0xff]
    %v483 = vld [vmem:[#allocation7 + $0x28] sm:$0xff]
    %v484 = vld [vmem:[#allocation7 + $0x30] sm:$0xff]
    %v485 = vld [vmem:[#allocation7 + $0x38] sm:$0xff]
    %v486 = vadd.f32 %v470, %v478
    %v487 = vadd.f32 %v471, %v479
    %v488 = vadd.f32 %v472, %v480
    %v489 = vadd.f32 %v473, %v481
    %v490 = vadd.f32 %v474, %v482
    %v491 = vadd.f32 %v475, %v483
    %v492 = vadd.f32 %v476, %v484
    %v493 = vadd.f32 %v477, %v485
    %494 = vrot.lane.b32.xlu0 %v486, 17
    %v495 = vpop.permute.xlu0 %494
    %496 = vrot.lane.b32.xlu0 %v487, 17
    %v497 = vpop.permute.xlu0 %496
    %498 = vrot.lane.b32.xlu0 %v488, 17
    %v499 = vpop.permute.xlu0 %498
    %500 = vrot.lane.b32.xlu0 %v489, 17
    %v501 = vpop.permute.xlu0 %500
    %502 = vrot.lane.b32.xlu0 %v490, 17
    %v503 = vpop.permute.xlu0 %502
    %504 = vrot.lane.b32.xlu0 %v491, 17
    %v505 = vpop.permute.xlu0 %504
    %506 = vrot.lane.b32.xlu0 %v492, 17
    %v507 = vpop.permute.xlu0 %506
    %508 = vrot.lane.b32.xlu0 %v493, 17
    %v509 = vpop.permute.xlu0 %508
    %v510 = vsel %vm104, %v507, %v509
    %v511 = vsel %vm104, %v505, %v507
    %v512 = vsel %vm104, %v503, %v505
    %v513 = vsel %vm104, %v501, %v503
    %v514 = vsel %vm104, %v499, %v501
    %v515 = vsel %vm104, %v497, %v499
    %v516 = vsel %vm104, %v495, %v497
    %v517 = vsel %vm104, %v509, %v495
    %518 = vrot.lane.b32.xlu0 %v486, 16
    %v519 = vpop.permute.xlu0 %518
    %520 = vrot.lane.b32.xlu0 %v487, 16
    %v521 = vpop.permute.xlu0 %520
    %522 = vrot.lane.b32.xlu0 %v488, 16
    %v523 = vpop.permute.xlu0 %522
    %524 = vrot.lane.b32.xlu0 %v489, 16
    %v525 = vpop.permute.xlu0 %524
    %526 = vrot.lane.b32.xlu0 %v490, 16
    %v527 = vpop.permute.xlu0 %526
    %528 = vrot.lane.b32.xlu0 %v491, 16
    %v529 = vpop.permute.xlu0 %528
    %530 = vrot.lane.b32.xlu0 %v492, 16
    %v531 = vpop.permute.xlu0 %530
    %532 = vrot.lane.b32.xlu0 %v493, 16
    %v533 = vpop.permute.xlu0 %532
    %v534 = vsel %vm129, %v531, %v533
    %v535 = vsel %vm129, %v529, %v531
    %v536 = vsel %vm129, %v527, %v529
    %v537 = vsel %vm129, %v525, %v527
    %v538 = vsel %vm129, %v523, %v525
    %v539 = vsel %vm129, %v521, %v523
    %v540 = vsel %vm129, %v519, %v521
    %v541 = vsel %vm129, %v533, %v519
    %542 = vrot.lane.b32.xlu0 %v486, 15
    %v543 = vpop.permute.xlu0 %542
    %544 = vrot.lane.b32.xlu0 %v487, 15
    %v545 = vpop.permute.xlu0 %544
    %546 = vrot.lane.b32.xlu0 %v488, 15
    %v547 = vpop.permute.xlu0 %546
    %548 = vrot.lane.b32.xlu0 %v489, 15
    %v549 = vpop.permute.xlu0 %548
    %550 = vrot.lane.b32.xlu0 %v490, 15
    %v551 = vpop.permute.xlu0 %550
    %552 = vrot.lane.b32.xlu0 %v491, 15
    %v553 = vpop.permute.xlu0 %552
    %554 = vrot.lane.b32.xlu0 %v492, 15
    %v555 = vpop.permute.xlu0 %554
    %556 = vrot.lane.b32.xlu0 %v493, 15
    %v557 = vpop.permute.xlu0 %556
    %v558 = vsel %vm154, %v555, %v557
    %v559 = vsel %vm154, %v553, %v555
    %v560 = vsel %vm154, %v551, %v553
    %v561 = vsel %vm154, %v549, %v551
    %v562 = vsel %vm154, %v547, %v549
    %v563 = vsel %vm154, %v545, %v547
    %v564 = vsel %vm154, %v543, %v545
    %v565 = vsel %vm154, %v557, %v543
    %566 = vrot.lane.b32.xlu0 %v486, 1
    %v567 = vpop.permute.xlu0 %566
    %568 = vrot.lane.b32.xlu0 %v487, 1
    %v569 = vpop.permute.xlu0 %568
    %570 = vrot.lane.b32.xlu0 %v488, 1
    %v571 = vpop.permute.xlu0 %570
    %572 = vrot.lane.b32.xlu0 %v489, 1
    %v573 = vpop.permute.xlu0 %572
    %574 = vrot.lane.b32.xlu0 %v490, 1
    %v575 = vpop.permute.xlu0 %574
    %576 = vrot.lane.b32.xlu0 %v491, 1
    %v577 = vpop.permute.xlu0 %576
    %578 = vrot.lane.b32.xlu0 %v492, 1
    %v579 = vpop.permute.xlu0 %578
    %580 = vrot.lane.b32.xlu0 %v493, 1
    %v581 = vpop.permute.xlu0 %580
    %v582 = vsel %vm179, %v579, %v581
    %v583 = vsel %vm179, %v577, %v579
    %v584 = vsel %vm179, %v575, %v577
    %v585 = vsel %vm179, %v573, %v575
    %v586 = vsel %vm179, %v571, %v573
    %v587 = vsel %vm179, %v569, %v571
    %v588 = vsel %vm179, %v567, %v569
    %v589 = vsel %vm179, %v581, %v567
    %590 = vrot.lane.b32.xlu0 %v486, 127
    %v591 = vpop.permute.xlu0 %590
    %592 = vrot.lane.b32.xlu0 %v487, 127
    %v593 = vpop.permute.xlu0 %592
    %594 = vrot.lane.b32.xlu0 %v488, 127
    %v595 = vpop.permute.xlu0 %594
    %596 = vrot.lane.b32.xlu0 %v489, 127
    %v597 = vpop.permute.xlu0 %596
    %598 = vrot.lane.b32.xlu0 %v490, 127
    %v599 = vpop.permute.xlu0 %598
    %600 = vrot.lane.b32.xlu0 %v491, 127
    %v601 = vpop.permute.xlu0 %600
    %602 = vrot.lane.b32.xlu0 %v492, 127
    %v603 = vpop.permute.xlu0 %602
    %604 = vrot.lane.b32.xlu0 %v493, 127
    %v605 = vpop.permute.xlu0 %604
    %v606 = vsel %vm204, %v603, %v605
    %v607 = vsel %vm204, %v601, %v603
    %v608 = vsel %vm204, %v599, %v601
    %v609 = vsel %vm204, %v597, %v599
    %v610 = vsel %vm204, %v595, %v597
    %v611 = vsel %vm204, %v593, %v595
    %v612 = vsel %vm204, %v591, %v593
    %v613 = vsel %vm204, %v605, %v591
    %614 = vrot.lane.b32.xlu0 %v486, 113
    %v615 = vpop.permute.xlu0 %614
    %616 = vrot.lane.b32.xlu0 %v487, 113
    %v617 = vpop.permute.xlu0 %616
    %618 = vrot.lane.b32.xlu0 %v488, 113
    %v619 = vpop.permute.xlu0 %618
    %620 = vrot.lane.b32.xlu0 %v489, 113
    %v621 = vpop.permute.xlu0 %620
    %622 = vrot.lane.b32.xlu0 %v490, 113
    %v623 = vpop.permute.xlu0 %622
    %624 = vrot.lane.b32.xlu0 %v491, 113
    %v625 = vpop.permute.xlu0 %624
    %626 = vrot.lane.b32.xlu0 %v492, 113
    %v627 = vpop.permute.xlu0 %626
    %628 = vrot.lane.b32.xlu0 %v493, 113
    %v629 = vpop.permute.xlu0 %628
    %v630 = vsel %vm229, %v627, %v629
    %v631 = vsel %vm229, %v625, %v627
    %v632 = vsel %vm229, %v623, %v625
    %v633 = vsel %vm229, %v621, %v623
    %v634 = vsel %vm229, %v619, %v621
    %v635 = vsel %vm229, %v617, %v619
    %v636 = vsel %vm229, %v615, %v617
    %v637 = vsel %vm229, %v629, %v615
    %638 = vrot.lane.b32.xlu0 %v486, 112
    %v639 = vpop.permute.xlu0 %638
    %640 = vrot.lane.b32.xlu0 %v487, 112
    %v641 = vpop.permute.xlu0 %640
    %642 = vrot.lane.b32.xlu0 %v488, 112
    %v643 = vpop.permute.xlu0 %642
    %644 = vrot.lane.b32.xlu0 %v489, 112
    %v645 = vpop.permute.xlu0 %644
    %646 = vrot.lane.b32.xlu0 %v490, 112
    %v647 = vpop.permute.xlu0 %646
    %648 = vrot.lane.b32.xlu0 %v491, 112
    %v649 = vpop.permute.xlu0 %648
    %650 = vrot.lane.b32.xlu0 %v492, 112
    %v651 = vpop.permute.xlu0 %650
    %652 = vrot.lane.b32.xlu0 %v493, 112
    %v653 = vpop.permute.xlu0 %652
    %v654 = vsel %vm254, %v651, %v653
    %v655 = vsel %vm254, %v649, %v651
    %v656 = vsel %vm254, %v647, %v649
    %v657 = vsel %vm254, %v645, %v647
    %v658 = vsel %vm254, %v643, %v645
    %v659 = vsel %vm254, %v641, %v643
    %v660 = vsel %vm254, %v639, %v641
    %v661 = vsel %vm254, %v653, %v639
    %662 = vrot.lane.b32.xlu0 %v486, 111
    %v663 = vpop.permute.xlu0 %662
    %664 = vrot.lane.b32.xlu0 %v487, 111
    %v665 = vpop.permute.xlu0 %664
    %666 = vrot.lane.b32.xlu0 %v488, 111
    %v667 = vpop.permute.xlu0 %666
    %668 = vrot.lane.b32.xlu0 %v489, 111
    %v669 = vpop.permute.xlu0 %668
    %670 = vrot.lane.b32.xlu0 %v490, 111
    %v671 = vpop.permute.xlu0 %670
    %672 = vrot.lane.b32.xlu0 %v491, 111
    %v673 = vpop.permute.xlu0 %672
    %674 = vrot.lane.b32.xlu0 %v492, 111
    %v675 = vpop.permute.xlu0 %674
    %676 = vrot.lane.b32.xlu0 %v493, 111
    %v677 = vpop.permute.xlu0 %676
    %v678 = vsel %vm279, %v675, %v677
    %v679 = vsel %vm279, %v673, %v675
    %v680 = vsel %vm279, %v671, %v673
    %v681 = vsel %vm279, %v669, %v671
    %v682 = vsel %vm279, %v667, %v669
    %v683 = vsel %vm279, %v665, %v667
    %v684 = vsel %vm279, %v663, %v665
    %v685 = vsel %vm279, %v677, %v663
    %s686 = scalar_lea.vmem [#allocation5], 8
    %v687 = vld [vmem:[%s686] sm:$0xff]
    %v689 = vsel %vm289, %v687, 0
    %691 = vmatpush.msra.mxu0 0.0
    %692 = vmatpush.msra.mxu0 0.0
    %693 = vmatpush.msra.mxu0 0.0
    %694 = vmatpush.msra.mxu0 0.0
    %695 = vmatpush.msra.mxu0 0.0
    %696 = vmatpush.msra.mxu0 0.0
    %697 = vmatpush.msra.mxu0 0.0
    %698 = vmatpush.msra.mxu0 %v684
    %699 = vmatpush.msra.mxu0 %v660
    %700 = vmatpush.msra.mxu0 %v636
    %701 = vmatpush.msra.mxu0 %v612
    %702 = vmatpush.msra.mxu0 %v486
    %703 = vmatpush.msra.mxu0 %v589
    %704 = vmatpush.msra.mxu0 %v565
    %705 = vmatpush.msra.mxu0 %v541
    %706 = vmatpush.msra.mxu0 %v517
    %707 = vmatmul.f32.gmra.mxu0 %v689
    %v708 = vpop.f32.mrf.mxu0
    %v709 = vadd.f32 0.0, %v708
    %710 = vdwg.mxu0
    %711 = vmatpush.msra.mxu0 0.0
    %712 = vmatpush.msra.mxu0 0.0
    %713 = vmatpush.msra.mxu0 0.0
    %714 = vmatpush.msra.mxu0 0.0
    %715 = vmatpush.msra.mxu0 0.0
    %716 = vmatpush.msra.mxu0 0.0
    %717 = vmatpush.msra.mxu0 0.0
    %718 = vmatpush.msra.mxu0 %v683
    %719 = vmatpush.msra.mxu0 %v659
    %720 = vmatpush.msra.mxu0 %v635
    %721 = vmatpush.msra.mxu0 %v611
    %722 = vmatpush.msra.mxu0 %v487
    %723 = vmatpush.msra.mxu0 %v588
    %724 = vmatpush.msra.mxu0 %v564
    %725 = vmatpush.msra.mxu0 %v540
    %726 = vmatpush.msra.mxu0 %v516
    %727 = vmatmul.f32.gmra.mxu0 %v689
    %v728 = vpop.f32.mrf.mxu0
    %v729 = vadd.f32 0.0, %v728
    %730 = vdwg.mxu0
    %731 = vmatpush.msra.mxu0 0.0
    %732 = vmatpush.msra.mxu0 0.0
    %733 = vmatpush.msra.mxu0 0.0
    %734 = vmatpush.msra.mxu0 0.0
    %735 = vmatpush.msra.mxu0 0.0
    %736 = vmatpush.msra.mxu0 0.0
    %737 = vmatpush.msra.mxu0 0.0
    %738 = vmatpush.msra.mxu0 %v682
    %739 = vmatpush.msra.mxu0 %v658
    %740 = vmatpush.msra.mxu0 %v634
    %741 = vmatpush.msra.mxu0 %v610
    %742 = vmatpush.msra.mxu0 %v488
    %743 = vmatpush.msra.mxu0 %v587
    %744 = vmatpush.msra.mxu0 %v563
    %745 = vmatpush.msra.mxu0 %v539
    %746 = vmatpush.msra.mxu0 %v515
    %747 = vmatmul.f32.gmra.mxu0 %v689
    %v748 = vpop.f32.mrf.mxu0
    %v749 = vadd.f32 0.0, %v748
    %750 = vdwg.mxu0
    %751 = vmatpush.msra.mxu0 0.0
    %752 = vmatpush.msra.mxu0 0.0
    %753 = vmatpush.msra.mxu0 0.0
    %754 = vmatpush.msra.mxu0 0.0
    %755 = vmatpush.msra.mxu0 0.0
    %756 = vmatpush.msra.mxu0 0.0
    %757 = vmatpush.msra.mxu0 0.0
    %758 = vmatpush.msra.mxu0 %v681
    %759 = vmatpush.msra.mxu0 %v657
    %760 = vmatpush.msra.mxu0 %v633
    %761 = vmatpush.msra.mxu0 %v609
    %762 = vmatpush.msra.mxu0 %v489
    %763 = vmatpush.msra.mxu0 %v586
    %764 = vmatpush.msra.mxu0 %v562
    %765 = vmatpush.msra.mxu0 %v538
    %766 = vmatpush.msra.mxu0 %v514
    %767 = vmatmul.f32.gmra.mxu0 %v689
    %v768 = vpop.f32.mrf.mxu0
    %v769 = vadd.f32 0.0, %v768
    %770 = vdwg.mxu0
    %771 = vmatpush.msra.mxu0 0.0
    %772 = vmatpush.msra.mxu0 0.0
    %773 = vmatpush.msra.mxu0 0.0
    %774 = vmatpush.msra.mxu0 0.0
    %775 = vmatpush.msra.mxu0 0.0
    %776 = vmatpush.msra.mxu0 0.0
    %777 = vmatpush.msra.mxu0 0.0
    %778 = vmatpush.msra.mxu0 %v680
    %779 = vmatpush.msra.mxu0 %v656
    %780 = vmatpush.msra.mxu0 %v632
    %781 = vmatpush.msra.mxu0 %v608
    %782 = vmatpush.msra.mxu0 %v490
    %783 = vmatpush.msra.mxu0 %v585
    %784 = vmatpush.msra.mxu0 %v561
    %785 = vmatpush.msra.mxu0 %v537
    %786 = vmatpush.msra.mxu0 %v513
    %787 = vmatmul.f32.gmra.mxu0 %v689
    %v788 = vpop.f32.mrf.mxu0
    %v789 = vadd.f32 0.0, %v788
    %790 = vdwg.mxu0
    %791 = vmatpush.msra.mxu0 0.0
    %792 = vmatpush.msra.mxu0 0.0
    %793 = vmatpush.msra.mxu0 0.0
    %794 = vmatpush.msra.mxu0 0.0
    %795 = vmatpush.msra.mxu0 0.0
    %796 = vmatpush.msra.mxu0 0.0
    %797 = vmatpush.msra.mxu0 0.0
    %798 = vmatpush.msra.mxu0 %v679
    %799 = vmatpush.msra.mxu0 %v655
    %800 = vmatpush.msra.mxu0 %v631
    %801 = vmatpush.msra.mxu0 %v607
    %802 = vmatpush.msra.mxu0 %v491
    %803 = vmatpush.msra.mxu0 %v584
    %804 = vmatpush.msra.mxu0 %v560
    %805 = vmatpush.msra.mxu0 %v536
    %806 = vmatpush.msra.mxu0 %v512
    %807 = vmatmul.f32.gmra.mxu0 %v689
    %v808 = vpop.f32.mrf.mxu0
    %v809 = vadd.f32 0.0, %v808
    %810 = vdwg.mxu0
    %811 = vmatpush.msra.mxu0 0.0
    %812 = vmatpush.msra.mxu0 0.0
    %813 = vmatpush.msra.mxu0 0.0
    %814 = vmatpush.msra.mxu0 0.0
    %815 = vmatpush.msra.mxu0 0.0
    %816 = vmatpush.msra.mxu0 0.0
    %817 = vmatpush.msra.mxu0 0.0
    %818 = vmatpush.msra.mxu0 %v678
    %819 = vmatpush.msra.mxu0 %v654
    %820 = vmatpush.msra.mxu0 %v630
    %821 = vmatpush.msra.mxu0 %v606
    %822 = vmatpush.msra.mxu0 %v492
    %823 = vmatpush.msra.mxu0 %v583
    %824 = vmatpush.msra.mxu0 %v559
    %825 = vmatpush.msra.mxu0 %v535
    %826 = vmatpush.msra.mxu0 %v511
    %827 = vmatmul.f32.gmra.mxu0 %v689
    %v828 = vpop.f32.mrf.mxu0
    %v829 = vadd.f32 0.0, %v828
    %830 = vdwg.mxu0
    %831 = vmatpush.msra.mxu0 0.0
    %832 = vmatpush.msra.mxu0 0.0
    %833 = vmatpush.msra.mxu0 0.0
    %834 = vmatpush.msra.mxu0 0.0
    %835 = vmatpush.msra.mxu0 0.0
    %836 = vmatpush.msra.mxu0 0.0
    %837 = vmatpush.msra.mxu0 0.0
    %838 = vmatpush.msra.mxu0 %v685
    %839 = vmatpush.msra.mxu0 %v661
    %840 = vmatpush.msra.mxu0 %v637
    %841 = vmatpush.msra.mxu0 %v613
    %842 = vmatpush.msra.mxu0 %v493
    %843 = vmatpush.msra.mxu0 %v582
    %844 = vmatpush.msra.mxu0 %v558
    %845 = vmatpush.msra.mxu0 %v534
    %846 = vmatpush.msra.mxu0 %v510
    %847 = vmatmul.f32.gmra.mxu0 %v689
    %v848 = vpop.f32.mrf.mxu0
    %v849 = vadd.f32 0.0, %v848
    %850 = vdwg.mxu0
    %v851 = vmul.f32 %v709, %v454
    %v852 = vmul.f32 %v729, %v455
    %v853 = vmul.f32 %v749, %v456
    %v854 = vmul.f32 %v769, %v457
    %v855 = vmul.f32 %v789, %v458
    %v856 = vmul.f32 %v809, %v459
    %v857 = vmul.f32 %v829, %v460
    %v858 = vmul.f32 %v849, %v461
    %s859 = scalar_lea.vmem [#allocation7], 64
    %v860 = vld [vmem:[%s859] sm:$0xff]
    %v861 = vld [vmem:[%s859 + $0x8] sm:$0xff]
    %v862 = vld [vmem:[%s859 + $0x10] sm:$0xff]
    %v863 = vld [vmem:[%s859 + $0x18] sm:$0xff]
    %v864 = vld [vmem:[%s859 + $0x20] sm:$0xff]
    %v865 = vld [vmem:[%s859 + $0x28] sm:$0xff]
    %v866 = vld [vmem:[%s859 + $0x30] sm:$0xff]
    %v867 = vld [vmem:[%s859 + $0x38] sm:$0xff]
    %v868 = vadd.f32 %v851, %v860
    %v869 = vadd.f32 %v852, %v861
    %v870 = vadd.f32 %v853, %v862
    %v871 = vadd.f32 %v854, %v863
    %v872 = vadd.f32 %v855, %v864
    %v873 = vadd.f32 %v856, %v865
    %v874 = vadd.f32 %v857, %v866
    %v875 = vadd.f32 %v858, %v867
    %876 = vrot.lane.b32.xlu0 %v868, 17
    %v877 = vpop.permute.xlu0 %876
    %878 = vrot.lane.b32.xlu0 %v869, 17
    %v879 = vpop.permute.xlu0 %878
    %880 = vrot.lane.b32.xlu0 %v870, 17
    %v881 = vpop.permute.xlu0 %880
    %882 = vrot.lane.b32.xlu0 %v871, 17
    %v883 = vpop.permute.xlu0 %882
    %884 = vrot.lane.b32.xlu0 %v872, 17
    %v885 = vpop.permute.xlu0 %884
    %886 = vrot.lane.b32.xlu0 %v873, 17
    %v887 = vpop.permute.xlu0 %886
    %888 = vrot.lane.b32.xlu0 %v874, 17
    %v889 = vpop.permute.xlu0 %888
    %890 = vrot.lane.b32.xlu0 %v875, 17
    %v891 = vpop.permute.xlu0 %890
    %v892 = vsel %vm104, %v889, %v891
    %v893 = vsel %vm104, %v887, %v889
    %v894 = vsel %vm104, %v885, %v887
    %v895 = vsel %vm104, %v883, %v885
    %v896 = vsel %vm104, %v881, %v883
    %v897 = vsel %vm104, %v879, %v881
    %v898 = vsel %vm104, %v877, %v879
    %v899 = vsel %vm104, %v891, %v877
    %900 = vrot.lane.b32.xlu0 %v868, 16
    %v901 = vpop.permute.xlu0 %900
    %902 = vrot.lane.b32.xlu0 %v869, 16
    %v903 = vpop.permute.xlu0 %902
    %904 = vrot.lane.b32.xlu0 %v870, 16
    %v905 = vpop.permute.xlu0 %904
    %906 = vrot.lane.b32.xlu0 %v871, 16
    %v907 = vpop.permute.xlu0 %906
    %908 = vrot.lane.b32.xlu0 %v872, 16
    %v909 = vpop.permute.xlu0 %908
    %910 = vrot.lane.b32.xlu0 %v873, 16
    %v911 = vpop.permute.xlu0 %910
    %912 = vrot.lane.b32.xlu0 %v874, 16
    %v913 = vpop.permute.xlu0 %912
    %914 = vrot.lane.b32.xlu0 %v875, 16
    %v915 = vpop.permute.xlu0 %914
    %v916 = vsel %vm129, %v913, %v915
    %v917 = vsel %vm129, %v911, %v913
    %v918 = vsel %vm129, %v909, %v911
    %v919 = vsel %vm129, %v907, %v909
    %v920 = vsel %vm129, %v905, %v907
    %v921 = vsel %vm129, %v903, %v905
    %v922 = vsel %vm129, %v901, %v903
    %v923 = vsel %vm129, %v915, %v901
    %924 = vrot.lane.b32.xlu0 %v868, 15
    %v925 = vpop.permute.xlu0 %924
    %926 = vrot.lane.b32.xlu0 %v869, 15
    %v927 = vpop.permute.xlu0 %926
    %928 = vrot.lane.b32.xlu0 %v870, 15
    %v929 = vpop.permute.xlu0 %928
    %930 = vrot.lane.b32.xlu0 %v871, 15
    %v931 = vpop.permute.xlu0 %930
    %932 = vrot.lane.b32.xlu0 %v872, 15
    %v933 = vpop.permute.xlu0 %932
    %934 = vrot.lane.b32.xlu0 %v873, 15
    %v935 = vpop.permute.xlu0 %934
    %936 = vrot.lane.b32.xlu0 %v874, 15
    %v937 = vpop.permute.xlu0 %936
    %938 = vrot.lane.b32.xlu0 %v875, 15
    %v939 = vpop.permute.xlu0 %938
    %v940 = vsel %vm154, %v937, %v939
    %v941 = vsel %vm154, %v935, %v937
    %v942 = vsel %vm154, %v933, %v935
    %v943 = vsel %vm154, %v931, %v933
    %v944 = vsel %vm154, %v929, %v931
    %v945 = vsel %vm154, %v927, %v929
    %v946 = vsel %vm154, %v925, %v927
    %v947 = vsel %vm154, %v939, %v925
    %948 = vrot.lane.b32.xlu0 %v868, 1
    %v949 = vpop.permute.xlu0 %948
    %950 = vrot.lane.b32.xlu0 %v869, 1
    %v951 = vpop.permute.xlu0 %950
    %952 = vrot.lane.b32.xlu0 %v870, 1
    %v953 = vpop.permute.xlu0 %952
    %954 = vrot.lane.b32.xlu0 %v871, 1
    %v955 = vpop.permute.xlu0 %954
    %956 = vrot.lane.b32.xlu0 %v872, 1
    %v957 = vpop.permute.xlu0 %956
    %958 = vrot.lane.b32.xlu0 %v873, 1
    %v959 = vpop.permute.xlu0 %958
    %960 = vrot.lane.b32.xlu0 %v874, 1
    %v961 = vpop.permute.xlu0 %960
    %962 = vrot.lane.b32.xlu0 %v875, 1
    %v963 = vpop.permute.xlu0 %962
    %v964 = vsel %vm179, %v961, %v963
    %v965 = vsel %vm179, %v959, %v961
    %v966 = vsel %vm179, %v957, %v959
    %v967 = vsel %vm179, %v955, %v957
    %v968 = vsel %vm179, %v953, %v955
    %v969 = vsel %vm179, %v951, %v953
    %v970 = vsel %vm179, %v949, %v951
    %v971 = vsel %vm179, %v963, %v949
    %972 = vrot.lane.b32.xlu0 %v868, 127
    %v973 = vpop.permute.xlu0 %972
    %974 = vrot.lane.b32.xlu0 %v869, 127
    %v975 = vpop.permute.xlu0 %974
    %976 = vrot.lane.b32.xlu0 %v870, 127
    %v977 = vpop.permute.xlu0 %976
    %978 = vrot.lane.b32.xlu0 %v871, 127
    %v979 = vpop.permute.xlu0 %978
    %980 = vrot.lane.b32.xlu0 %v872, 127
    %v981 = vpop.permute.xlu0 %980
    %982 = vrot.lane.b32.xlu0 %v873, 127
    %v983 = vpop.permute.xlu0 %982
    %984 = vrot.lane.b32.xlu0 %v874, 127
    %v985 = vpop.permute.xlu0 %984
    %986 = vrot.lane.b32.xlu0 %v875, 127
    %v987 = vpop.permute.xlu0 %986
    %v988 = vsel %vm204, %v985, %v987
    %v989 = vsel %vm204, %v983, %v985
    %v990 = vsel %vm204, %v981, %v983
    %v991 = vsel %vm204, %v979, %v981
    %v992 = vsel %vm204, %v977, %v979
    %v993 = vsel %vm204, %v975, %v977
    %v994 = vsel %vm204, %v973, %v975
    %v995 = vsel %vm204, %v987, %v973
    %996 = vrot.lane.b32.xlu0 %v868, 113
    %v997 = vpop.permute.xlu0 %996
    %998 = vrot.lane.b32.xlu0 %v869, 113
    %v999 = vpop.permute.xlu0 %998
    %1000 = vrot.lane.b32.xlu0 %v870, 113
    %v1001 = vpop.permute.xlu0 %1000
    %1002 = vrot.lane.b32.xlu0 %v871, 113
    %v1003 = vpop.permute.xlu0 %1002
    %1004 = vrot.lane.b32.xlu0 %v872, 113
    %v1005 = vpop.permute.xlu0 %1004
    %1006 = vrot.lane.b32.xlu0 %v873, 113
    %v1007 = vpop.permute.xlu0 %1006
    %1008 = vrot.lane.b32.xlu0 %v874, 113
    %v1009 = vpop.permute.xlu0 %1008
    %1010 = vrot.lane.b32.xlu0 %v875, 113
    %v1011 = vpop.permute.xlu0 %1010
    %v1012 = vsel %vm229, %v1009, %v1011
    %v1013 = vsel %vm229, %v1007, %v1009
    %v1014 = vsel %vm229, %v1005, %v1007
    %v1015 = vsel %vm229, %v1003, %v1005
    %v1016 = vsel %vm229, %v1001, %v1003
    %v1017 = vsel %vm229, %v999, %v1001
    %v1018 = vsel %vm229, %v997, %v999
    %v1019 = vsel %vm229, %v1011, %v997
    %1020 = vrot.lane.b32.xlu0 %v868, 112
    %v1021 = vpop.permute.xlu0 %1020
    %1022 = vrot.lane.b32.xlu0 %v869, 112
    %v1023 = vpop.permute.xlu0 %1022
    %1024 = vrot.lane.b32.xlu0 %v870, 112
    %v1025 = vpop.permute.xlu0 %1024
    %1026 = vrot.lane.b32.xlu0 %v871, 112
    %v1027 = vpop.permute.xlu0 %1026
    %1028 = vrot.lane.b32.xlu0 %v872, 112
    %v1029 = vpop.permute.xlu0 %1028
    %1030 = vrot.lane.b32.xlu0 %v873, 112
    %v1031 = vpop.permute.xlu0 %1030
    %1032 = vrot.lane.b32.xlu0 %v874, 112
    %v1033 = vpop.permute.xlu0 %1032
    %1034 = vrot.lane.b32.xlu0 %v875, 112
    %v1035 = vpop.permute.xlu0 %1034
    %v1036 = vsel %vm254, %v1033, %v1035
    %v1037 = vsel %vm254, %v1031, %v1033
    %v1038 = vsel %vm254, %v1029, %v1031
    %v1039 = vsel %vm254, %v1027, %v1029
    %v1040 = vsel %vm254, %v1025, %v1027
    %v1041 = vsel %vm254, %v1023, %v1025
    %v1042 = vsel %vm254, %v1021, %v1023
    %v1043 = vsel %vm254, %v1035, %v1021
    %1044 = vrot.lane.b32.xlu0 %v868, 111
    %v1045 = vpop.permute.xlu0 %1044
    %1046 = vrot.lane.b32.xlu0 %v869, 111
    %v1047 = vpop.permute.xlu0 %1046
    %1048 = vrot.lane.b32.xlu0 %v870, 111
    %v1049 = vpop.permute.xlu0 %1048
    %1050 = vrot.lane.b32.xlu0 %v871, 111
    %v1051 = vpop.permute.xlu0 %1050
    %1052 = vrot.lane.b32.xlu0 %v872, 111
    %v1053 = vpop.permute.xlu0 %1052
    %1054 = vrot.lane.b32.xlu0 %v873, 111
    %v1055 = vpop.permute.xlu0 %1054
    %1056 = vrot.lane.b32.xlu0 %v874, 111
    %v1057 = vpop.permute.xlu0 %1056
    %1058 = vrot.lane.b32.xlu0 %v875, 111
    %v1059 = vpop.permute.xlu0 %1058
    %v1060 = vsel %vm279, %v1057, %v1059
    %v1061 = vsel %vm279, %v1055, %v1057
    %v1062 = vsel %vm279, %v1053, %v1055
    %v1063 = vsel %vm279, %v1051, %v1053
    %v1064 = vsel %vm279, %v1049, %v1051
    %v1065 = vsel %vm279, %v1047, %v1049
    %v1066 = vsel %vm279, %v1045, %v1047
    %v1067 = vsel %vm279, %v1059, %v1045
    %s1068 = scalar_lea.vmem [#allocation5], 16
    %v1069 = vld [vmem:[%s1068] sm:$0xff]
    %v1071 = vsel %vm289, %v1069, 0
    %1073 = vmatpush.msra.mxu0 0.0
    %1074 = vmatpush.msra.mxu0 0.0
    %1075 = vmatpush.msra.mxu0 0.0
    %1076 = vmatpush.msra.mxu0 0.0
    %1077 = vmatpush.msra.mxu0 0.0
    %1078 = vmatpush.msra.mxu0 0.0
    %1079 = vmatpush.msra.mxu0 0.0
    %1080 = vmatpush.msra.mxu0 %v1066
    %1081 = vmatpush.msra.mxu0 %v1042
    %1082 = vmatpush.msra.mxu0 %v1018
    %1083 = vmatpush.msra.mxu0 %v994
    %1084 = vmatpush.msra.mxu0 %v868
    %1085 = vmatpush.msra.mxu0 %v971
    %1086 = vmatpush.msra.mxu0 %v947
    %1087 = vmatpush.msra.mxu0 %v923
    %1088 = vmatpush.msra.mxu0 %v899
    %1089 = vmatmul.f32.gmra.mxu0 %v1071
    %v1090 = vpop.f32.mrf.mxu0
    %v1091 = vadd.f32 0.0, %v1090
    %1092 = vdwg.mxu0
    %1093 = vmatpush.msra.mxu0 0.0
    %1094 = vmatpush.msra.mxu0 0.0
    %1095 = vmatpush.msra.mxu0 0.0
    %1096 = vmatpush.msra.mxu0 0.0
    %1097 = vmatpush.msra.mxu0 0.0
    %1098 = vmatpush.msra.mxu0 0.0
    %1099 = vmatpush.msra.mxu0 0.0
    %1100 = vmatpush.msra.mxu0 %v1065
    %1101 = vmatpush.msra.mxu0 %v1041
    %1102 = vmatpush.msra.mxu0 %v1017
    %1103 = vmatpush.msra.mxu0 %v993
    %1104 = vmatpush.msra.mxu0 %v869
    %1105 = vmatpush.msra.mxu0 %v970
    %1106 = vmatpush.msra.mxu0 %v946
    %1107 = vmatpush.msra.mxu0 %v922
    %1108 = vmatpush.msra.mxu0 %v898
    %1109 = vmatmul.f32.gmra.mxu0 %v1071
    %v1110 = vpop.f32.mrf.mxu0
    %v1111 = vadd.f32 0.0, %v1110
    %1112 = vdwg.mxu0
    %1113 = vmatpush.msra.mxu0 0.0
    %1114 = vmatpush.msra.mxu0 0.0
    %1115 = vmatpush.msra.mxu0 0.0
    %1116 = vmatpush.msra.mxu0 0.0
    %1117 = vmatpush.msra.mxu0 0.0
    %1118 = vmatpush.msra.mxu0 0.0
    %1119 = vmatpush.msra.mxu0 0.0
    %1120 = vmatpush.msra.mxu0 %v1064
    %1121 = vmatpush.msra.mxu0 %v1040
    %1122 = vmatpush.msra.mxu0 %v1016
    %1123 = vmatpush.msra.mxu0 %v992
    %1124 = vmatpush.msra.mxu0 %v870
    %1125 = vmatpush.msra.mxu0 %v969
    %1126 = vmatpush.msra.mxu0 %v945
    %1127 = vmatpush.msra.mxu0 %v921
    %1128 = vmatpush.msra.mxu0 %v897
    %1129 = vmatmul.f32.gmra.mxu0 %v1071
    %v1130 = vpop.f32.mrf.mxu0
    %v1131 = vadd.f32 0.0, %v1130
    %1132 = vdwg.mxu0
    %1133 = vmatpush.msra.mxu0 0.0
    %1134 = vmatpush.msra.mxu0 0.0
    %1135 = vmatpush.msra.mxu0 0.0
    %1136 = vmatpush.msra.mxu0 0.0
    %1137 = vmatpush.msra.mxu0 0.0
    %1138 = vmatpush.msra.mxu0 0.0
    %1139 = vmatpush.msra.mxu0 0.0
    %1140 = vmatpush.msra.mxu0 %v1063
    %1141 = vmatpush.msra.mxu0 %v1039
    %1142 = vmatpush.msra.mxu0 %v1015
    %1143 = vmatpush.msra.mxu0 %v991
    %1144 = vmatpush.msra.mxu0 %v871
    %1145 = vmatpush.msra.mxu0 %v968
    %1146 = vmatpush.msra.mxu0 %v944
    %1147 = vmatpush.msra.mxu0 %v920
    %1148 = vmatpush.msra.mxu0 %v896
    %1149 = vmatmul.f32.gmra.mxu0 %v1071
    %v1150 = vpop.f32.mrf.mxu0
    %v1151 = vadd.f32 0.0, %v1150
    %1152 = vdwg.mxu0
    %1153 = vmatpush.msra.mxu0 0.0
    %1154 = vmatpush.msra.mxu0 0.0
    %1155 = vmatpush.msra.mxu0 0.0
    %1156 = vmatpush.msra.mxu0 0.0
    %1157 = vmatpush.msra.mxu0 0.0
    %1158 = vmatpush.msra.mxu0 0.0
    %1159 = vmatpush.msra.mxu0 0.0
    %1160 = vmatpush.msra.mxu0 %v1062
    %1161 = vmatpush.msra.mxu0 %v1038
    %1162 = vmatpush.msra.mxu0 %v1014
    %1163 = vmatpush.msra.mxu0 %v990
    %1164 = vmatpush.msra.mxu0 %v872
    %1165 = vmatpush.msra.mxu0 %v967
    %1166 = vmatpush.msra.mxu0 %v943
    %1167 = vmatpush.msra.mxu0 %v919
    %1168 = vmatpush.msra.mxu0 %v895
    %1169 = vmatmul.f32.gmra.mxu0 %v1071
    %v1170 = vpop.f32.mrf.mxu0
    %v1171 = vadd.f32 0.0, %v1170
    %1172 = vdwg.mxu0
    %1173 = vmatpush.msra.mxu0 0.0
    %1174 = vmatpush.msra.mxu0 0.0
    %1175 = vmatpush.msra.mxu0 0.0
    %1176 = vmatpush.msra.mxu0 0.0
    %1177 = vmatpush.msra.mxu0 0.0
    %1178 = vmatpush.msra.mxu0 0.0
    %1179 = vmatpush.msra.mxu0 0.0
    %1180 = vmatpush.msra.mxu0 %v1061
    %1181 = vmatpush.msra.mxu0 %v1037
    %1182 = vmatpush.msra.mxu0 %v1013
    %1183 = vmatpush.msra.mxu0 %v989
    %1184 = vmatpush.msra.mxu0 %v873
    %1185 = vmatpush.msra.mxu0 %v966
    %1186 = vmatpush.msra.mxu0 %v942
    %1187 = vmatpush.msra.mxu0 %v918
    %1188 = vmatpush.msra.mxu0 %v894
    %1189 = vmatmul.f32.gmra.mxu0 %v1071
    %v1190 = vpop.f32.mrf.mxu0
    %v1191 = vadd.f32 0.0, %v1190
    %1192 = vdwg.mxu0
    %1193 = vmatpush.msra.mxu0 0.0
    %1194 = vmatpush.msra.mxu0 0.0
    %1195 = vmatpush.msra.mxu0 0.0
    %1196 = vmatpush.msra.mxu0 0.0
    %1197 = vmatpush.msra.mxu0 0.0
    %1198 = vmatpush.msra.mxu0 0.0
    %1199 = vmatpush.msra.mxu0 0.0
    %1200 = vmatpush.msra.mxu0 %v1060
    %1201 = vmatpush.msra.mxu0 %v1036
    %1202 = vmatpush.msra.mxu0 %v1012
    %1203 = vmatpush.msra.mxu0 %v988
    %1204 = vmatpush.msra.mxu0 %v874
    %1205 = vmatpush.msra.mxu0 %v965
    %1206 = vmatpush.msra.mxu0 %v941
    %1207 = vmatpush.msra.mxu0 %v917
    %1208 = vmatpush.msra.mxu0 %v893
    %1209 = vmatmul.f32.gmra.mxu0 %v1071
    %v1210 = vpop.f32.mrf.mxu0
    %v1211 = vadd.f32 0.0, %v1210
    %1212 = vdwg.mxu0
    %1213 = vmatpush.msra.mxu0 0.0
    %1214 = vmatpush.msra.mxu0 0.0
    %1215 = vmatpush.msra.mxu0 0.0
    %1216 = vmatpush.msra.mxu0 0.0
    %1217 = vmatpush.msra.mxu0 0.0
    %1218 = vmatpush.msra.mxu0 0.0
    %1219 = vmatpush.msra.mxu0 0.0
    %1220 = vmatpush.msra.mxu0 %v1067
    %1221 = vmatpush.msra.mxu0 %v1043
    %1222 = vmatpush.msra.mxu0 %v1019
    %1223 = vmatpush.msra.mxu0 %v995
    %1224 = vmatpush.msra.mxu0 %v875
    %1225 = vmatpush.msra.mxu0 %v964
    %1226 = vmatpush.msra.mxu0 %v940
    %1227 = vmatpush.msra.mxu0 %v916
    %1228 = vmatpush.msra.mxu0 %v892
    %1229 = vmatmul.f32.gmra.mxu0 %v1071
    %v1230 = vpop.f32.mrf.mxu0
    %v1231 = vadd.f32 0.0, %v1230
    %1232 = vdwg.mxu0
    %v1233 = vmul.f32 %v1091, %v454
    %v1234 = vmul.f32 %v1111, %v455
    %v1235 = vmul.f32 %v1131, %v456
    %v1236 = vmul.f32 %v1151, %v457
    %v1237 = vmul.f32 %v1171, %v458
    %v1238 = vmul.f32 %v1191, %v459
    %v1239 = vmul.f32 %v1211, %v460
    %v1240 = vmul.f32 %v1231, %v461
    %s1241 = scalar_lea.vmem [#allocation7], 128
    %v1242 = vld [vmem:[%s1241] sm:$0xff]
    %v1243 = vld [vmem:[%s1241 + $0x8] sm:$0xff]
    %v1244 = vld [vmem:[%s1241 + $0x10] sm:$0xff]
    %v1245 = vld [vmem:[%s1241 + $0x18] sm:$0xff]
    %v1246 = vld [vmem:[%s1241 + $0x20] sm:$0xff]
    %v1247 = vld [vmem:[%s1241 + $0x28] sm:$0xff]
    %v1248 = vld [vmem:[%s1241 + $0x30] sm:$0xff]
    %v1249 = vld [vmem:[%s1241 + $0x38] sm:$0xff]
    %v1250 = vadd.f32 %v1233, %v1242
    %v1251 = vadd.f32 %v1234, %v1243
    %v1252 = vadd.f32 %v1235, %v1244
    %v1253 = vadd.f32 %v1236, %v1245
    %v1254 = vadd.f32 %v1237, %v1246
    %v1255 = vadd.f32 %v1238, %v1247
    %v1256 = vadd.f32 %v1239, %v1248
    %v1257 = vadd.f32 %v1240, %v1249
    %1258 = vrot.lane.b32.xlu0 %v1250, 17
    %v1259 = vpop.permute.xlu0 %1258
    %1260 = vrot.lane.b32.xlu0 %v1251, 17
    %v1261 = vpop.permute.xlu0 %1260
    %1262 = vrot.lane.b32.xlu0 %v1252, 17
    %v1263 = vpop.permute.xlu0 %1262
    %1264 = vrot.lane.b32.xlu0 %v1253, 17
    %v1265 = vpop.permute.xlu0 %1264
    %1266 = vrot.lane.b32.xlu0 %v1254, 17
    %v1267 = vpop.permute.xlu0 %1266
    %1268 = vrot.lane.b32.xlu0 %v1255, 17
    %v1269 = vpop.permute.xlu0 %1268
    %1270 = vrot.lane.b32.xlu0 %v1256, 17
    %v1271 = vpop.permute.xlu0 %1270
    %1272 = vrot.lane.b32.xlu0 %v1257, 17
    %v1273 = vpop.permute.xlu0 %1272
    %v1274 = vsel %vm104, %v1271, %v1273
    %v1275 = vsel %vm104, %v1269, %v1271
    %v1276 = vsel %vm104, %v1267, %v1269
    %v1277 = vsel %vm104, %v1265, %v1267
    %v1278 = vsel %vm104, %v1263, %v1265
    %v1279 = vsel %vm104, %v1261, %v1263
    %v1280 = vsel %vm104, %v1259, %v1261
    %v1281 = vsel %vm104, %v1273, %v1259
    %1282 = vrot.lane.b32.xlu0 %v1250, 16
    %v1283 = vpop.permute.xlu0 %1282
    %1284 = vrot.lane.b32.xlu0 %v1251, 16
    %v1285 = vpop.permute.xlu0 %1284
    %1286 = vrot.lane.b32.xlu0 %v1252, 16
    %v1287 = vpop.permute.xlu0 %1286
    %1288 = vrot.lane.b32.xlu0 %v1253, 16
    %v1289 = vpop.permute.xlu0 %1288
    %1290 = vrot.lane.b32.xlu0 %v1254, 16
    %v1291 = vpop.permute.xlu0 %1290
    %1292 = vrot.lane.b32.xlu0 %v1255, 16
    %v1293 = vpop.permute.xlu0 %1292
    %1294 = vrot.lane.b32.xlu0 %v1256, 16
    %v1295 = vpop.permute.xlu0 %1294
    %1296 = vrot.lane.b32.xlu0 %v1257, 16
    %v1297 = vpop.permute.xlu0 %1296
    %v1298 = vsel %vm129, %v1295, %v1297
    %v1299 = vsel %vm129, %v1293, %v1295
    %v1300 = vsel %vm129, %v1291, %v1293
    %v1301 = vsel %vm129, %v1289, %v1291
    %v1302 = vsel %vm129, %v1287, %v1289
    %v1303 = vsel %vm129, %v1285, %v1287
    %v1304 = vsel %vm129, %v1283, %v1285
    %v1305 = vsel %vm129, %v1297, %v1283
    %1306 = vrot.lane.b32.xlu0 %v1250, 15
    %v1307 = vpop.permute.xlu0 %1306
    %1308 = vrot.lane.b32.xlu0 %v1251, 15
    %v1309 = vpop.permute.xlu0 %1308
    %1310 = vrot.lane.b32.xlu0 %v1252, 15
    %v1311 = vpop.permute.xlu0 %1310
    %1312 = vrot.lane.b32.xlu0 %v1253, 15
    %v1313 = vpop.permute.xlu0 %1312
    %1314 = vrot.lane.b32.xlu0 %v1254, 15
    %v1315 = vpop.permute.xlu0 %1314
    %1316 = vrot.lane.b32.xlu0 %v1255, 15
    %v1317 = vpop.permute.xlu0 %1316
    %1318 = vrot.lane.b32.xlu0 %v1256, 15
    %v1319 = vpop.permute.xlu0 %1318
    %1320 = vrot.lane.b32.xlu0 %v1257, 15
    %v1321 = vpop.permute.xlu0 %1320
    %v1322 = vsel %vm154, %v1319, %v1321
    %v1323 = vsel %vm154, %v1317, %v1319
    %v1324 = vsel %vm154, %v1315, %v1317
    %v1325 = vsel %vm154, %v1313, %v1315
    %v1326 = vsel %vm154, %v1311, %v1313
    %v1327 = vsel %vm154, %v1309, %v1311
    %v1328 = vsel %vm154, %v1307, %v1309
    %v1329 = vsel %vm154, %v1321, %v1307
    %1330 = vrot.lane.b32.xlu0 %v1250, 1
    %v1331 = vpop.permute.xlu0 %1330
    %1332 = vrot.lane.b32.xlu0 %v1251, 1
    %v1333 = vpop.permute.xlu0 %1332
    %1334 = vrot.lane.b32.xlu0 %v1252, 1
    %v1335 = vpop.permute.xlu0 %1334
    %1336 = vrot.lane.b32.xlu0 %v1253, 1
    %v1337 = vpop.permute.xlu0 %1336
    %1338 = vrot.lane.b32.xlu0 %v1254, 1
    %v1339 = vpop.permute.xlu0 %1338
    %1340 = vrot.lane.b32.xlu0 %v1255, 1
    %v1341 = vpop.permute.xlu0 %1340
    %1342 = vrot.lane.b32.xlu0 %v1256, 1
    %v1343 = vpop.permute.xlu0 %1342
    %1344 = vrot.lane.b32.xlu0 %v1257, 1
    %v1345 = vpop.permute.xlu0 %1344
    %v1346 = vsel %vm179, %v1343, %v1345
    %v1347 = vsel %vm179, %v1341, %v1343
    %v1348 = vsel %vm179, %v1339, %v1341
    %v1349 = vsel %vm179, %v1337, %v1339
    %v1350 = vsel %vm179, %v1335, %v1337
    %v1351 = vsel %vm179, %v1333, %v1335
    %v1352 = vsel %vm179, %v1331, %v1333
    %v1353 = vsel %vm179, %v1345, %v1331
    %1354 = vrot.lane.b32.xlu0 %v1250, 127
    %v1355 = vpop.permute.xlu0 %1354
    %1356 = vrot.lane.b32.xlu0 %v1251, 127
    %v1357 = vpop.permute.xlu0 %1356
    %1358 = vrot.lane.b32.xlu0 %v1252, 127
    %v1359 = vpop.permute.xlu0 %1358
    %1360 = vrot.lane.b32.xlu0 %v1253, 127
    %v1361 = vpop.permute.xlu0 %1360
    %1362 = vrot.lane.b32.xlu0 %v1254, 127
    %v1363 = vpop.permute.xlu0 %1362
    %1364 = vrot.lane.b32.xlu0 %v1255, 127
    %v1365 = vpop.permute.xlu0 %1364
    %1366 = vrot.lane.b32.xlu0 %v1256, 127
    %v1367 = vpop.permute.xlu0 %1366
    %1368 = vrot.lane.b32.xlu0 %v1257, 127
    %v1369 = vpop.permute.xlu0 %1368
    %v1370 = vsel %vm204, %v1367, %v1369
    %v1371 = vsel %vm204, %v1365, %v1367
    %v1372 = vsel %vm204, %v1363, %v1365
    %v1373 = vsel %vm204, %v1361, %v1363
    %v1374 = vsel %vm204, %v1359, %v1361
    %v1375 = vsel %vm204, %v1357, %v1359
    %v1376 = vsel %vm204, %v1355, %v1357
    %v1377 = vsel %vm204, %v1369, %v1355
    %1378 = vrot.lane.b32.xlu0 %v1250, 113
    %v1379 = vpop.permute.xlu0 %1378
    %1380 = vrot.lane.b32.xlu0 %v1251, 113
    %v1381 = vpop.permute.xlu0 %1380
    %1382 = vrot.lane.b32.xlu0 %v1252, 113
    %v1383 = vpop.permute.xlu0 %1382
    %1384 = vrot.lane.b32.xlu0 %v1253, 113
    %v1385 = vpop.permute.xlu0 %1384
    %1386 = vrot.lane.b32.xlu0 %v1254, 113
    %v1387 = vpop.permute.xlu0 %1386
    %1388 = vrot.lane.b32.xlu0 %v1255, 113
    %v1389 = vpop.permute.xlu0 %1388
    %1390 = vrot.lane.b32.xlu0 %v1256, 113
    %v1391 = vpop.permute.xlu0 %1390
    %1392 = vrot.lane.b32.xlu0 %v1257, 113
    %v1393 = vpop.permute.xlu0 %1392
    %v1394 = vsel %vm229, %v1391, %v1393
    %v1395 = vsel %vm229, %v1389, %v1391
    %v1396 = vsel %vm229, %v1387, %v1389
    %v1397 = vsel %vm229, %v1385, %v1387
    %v1398 = vsel %vm229, %v1383, %v1385
    %v1399 = vsel %vm229, %v1381, %v1383
    %v1400 = vsel %vm229, %v1379, %v1381
    %v1401 = vsel %vm229, %v1393, %v1379
    %1402 = vrot.lane.b32.xlu0 %v1250, 112
    %v1403 = vpop.permute.xlu0 %1402
    %1404 = vrot.lane.b32.xlu0 %v1251, 112
    %v1405 = vpop.permute.xlu0 %1404
    %1406 = vrot.lane.b32.xlu0 %v1252, 112
    %v1407 = vpop.permute.xlu0 %1406
    %1408 = vrot.lane.b32.xlu0 %v1253, 112
    %v1409 = vpop.permute.xlu0 %1408
    %1410 = vrot.lane.b32.xlu0 %v1254, 112
    %v1411 = vpop.permute.xlu0 %1410
    %1412 = vrot.lane.b32.xlu0 %v1255, 112
    %v1413 = vpop.permute.xlu0 %1412
    %1414 = vrot.lane.b32.xlu0 %v1256, 112
    %v1415 = vpop.permute.xlu0 %1414
    %1416 = vrot.lane.b32.xlu0 %v1257, 112
    %v1417 = vpop.permute.xlu0 %1416
    %v1418 = vsel %vm254, %v1415, %v1417
    %v1419 = vsel %vm254, %v1413, %v1415
    %v1420 = vsel %vm254, %v1411, %v1413
    %v1421 = vsel %vm254, %v1409, %v1411
    %v1422 = vsel %vm254, %v1407, %v1409
    %v1423 = vsel %vm254, %v1405, %v1407
    %v1424 = vsel %vm254, %v1403, %v1405
    %v1425 = vsel %vm254, %v1417, %v1403
    %1426 = vrot.lane.b32.xlu0 %v1250, 111
    %v1427 = vpop.permute.xlu0 %1426
    %1428 = vrot.lane.b32.xlu0 %v1251, 111
    %v1429 = vpop.permute.xlu0 %1428
    %1430 = vrot.lane.b32.xlu0 %v1252, 111
    %v1431 = vpop.permute.xlu0 %1430
    %1432 = vrot.lane.b32.xlu0 %v1253, 111
    %v1433 = vpop.permute.xlu0 %1432
    %1434 = vrot.lane.b32.xlu0 %v1254, 111
    %v1435 = vpop.permute.xlu0 %1434
    %1436 = vrot.lane.b32.xlu0 %v1255, 111
    %v1437 = vpop.permute.xlu0 %1436
    %1438 = vrot.lane.b32.xlu0 %v1256, 111
    %v1439 = vpop.permute.xlu0 %1438
    %1440 = vrot.lane.b32.xlu0 %v1257, 111
    %v1441 = vpop.permute.xlu0 %1440
    %v1442 = vsel %vm279, %v1439, %v1441
    %v1443 = vsel %vm279, %v1437, %v1439
    %v1444 = vsel %vm279, %v1435, %v1437
    %v1445 = vsel %vm279, %v1433, %v1435
    %v1446 = vsel %vm279, %v1431, %v1433
    %v1447 = vsel %vm279, %v1429, %v1431
    %v1448 = vsel %vm279, %v1427, %v1429
    %v1449 = vsel %vm279, %v1441, %v1427
    %s1450 = scalar_lea.vmem [#allocation5], 24
    %v1451 = vld [vmem:[%s1450] sm:$0xff]
    %v1453 = vsel %vm289, %v1451, 0
    %1455 = vmatpush.msra.mxu0 0.0
    %1456 = vmatpush.msra.mxu0 0.0
    %1457 = vmatpush.msra.mxu0 0.0
    %1458 = vmatpush.msra.mxu0 0.0
    %1459 = vmatpush.msra.mxu0 0.0
    %1460 = vmatpush.msra.mxu0 0.0
    %1461 = vmatpush.msra.mxu0 0.0
    %1462 = vmatpush.msra.mxu0 %v1448
    %1463 = vmatpush.msra.mxu0 %v1424
    %1464 = vmatpush.msra.mxu0 %v1400
    %1465 = vmatpush.msra.mxu0 %v1376
    %1466 = vmatpush.msra.mxu0 %v1250
    %1467 = vmatpush.msra.mxu0 %v1353
    %1468 = vmatpush.msra.mxu0 %v1329
    %1469 = vmatpush.msra.mxu0 %v1305
    %1470 = vmatpush.msra.mxu0 %v1281
    %1471 = vmatmul.f32.gmra.mxu0 %v1453
    %v1472 = vpop.f32.mrf.mxu0
    %v1473 = vadd.f32 0.0, %v1472
    %1474 = vdwg.mxu0
    %1475 = vmatpush.msra.mxu0 0.0
    %1476 = vmatpush.msra.mxu0 0.0
    %1477 = vmatpush.msra.mxu0 0.0
    %1478 = vmatpush.msra.mxu0 0.0
    %1479 = vmatpush.msra.mxu0 0.0
    %1480 = vmatpush.msra.mxu0 0.0
    %1481 = vmatpush.msra.mxu0 0.0
    %1482 = vmatpush.msra.mxu0 %v1447
    %1483 = vmatpush.msra.mxu0 %v1423
    %1484 = vmatpush.msra.mxu0 %v1399
    %1485 = vmatpush.msra.mxu0 %v1375
    %1486 = vmatpush.msra.mxu0 %v1251
    %1487 = vmatpush.msra.mxu0 %v1352
    %1488 = vmatpush.msra.mxu0 %v1328
    %1489 = vmatpush.msra.mxu0 %v1304
    %1490 = vmatpush.msra.mxu0 %v1280
    %1491 = vmatmul.f32.gmra.mxu0 %v1453
    %v1492 = vpop.f32.mrf.mxu0
    %v1493 = vadd.f32 0.0, %v1492
    %1494 = vdwg.mxu0
    %1495 = vmatpush.msra.mxu0 0.0
    %1496 = vmatpush.msra.mxu0 0.0
    %1497 = vmatpush.msra.mxu0 0.0
    %1498 = vmatpush.msra.mxu0 0.0
    %1499 = vmatpush.msra.mxu0 0.0
    %1500 = vmatpush.msra.mxu0 0.0
    %1501 = vmatpush.msra.mxu0 0.0
    %1502 = vmatpush.msra.mxu0 %v1446
    %1503 = vmatpush.msra.mxu0 %v1422
    %1504 = vmatpush.msra.mxu0 %v1398
    %1505 = vmatpush.msra.mxu0 %v1374
    %1506 = vmatpush.msra.mxu0 %v1252
    %1507 = vmatpush.msra.mxu0 %v1351
    %1508 = vmatpush.msra.mxu0 %v1327
    %1509 = vmatpush.msra.mxu0 %v1303
    %1510 = vmatpush.msra.mxu0 %v1279
    %1511 = vmatmul.f32.gmra.mxu0 %v1453
    %v1512 = vpop.f32.mrf.mxu0
    %v1513 = vadd.f32 0.0, %v1512
    %1514 = vdwg.mxu0
    %1515 = vmatpush.msra.mxu0 0.0
    %1516 = vmatpush.msra.mxu0 0.0
    %1517 = vmatpush.msra.mxu0 0.0
    %1518 = vmatpush.msra.mxu0 0.0
    %1519 = vmatpush.msra.mxu0 0.0
    %1520 = vmatpush.msra.mxu0 0.0
    %1521 = vmatpush.msra.mxu0 0.0
    %1522 = vmatpush.msra.mxu0 %v1445
    %1523 = vmatpush.msra.mxu0 %v1421
    %1524 = vmatpush.msra.mxu0 %v1397
    %1525 = vmatpush.msra.mxu0 %v1373
    %1526 = vmatpush.msra.mxu0 %v1253
    %1527 = vmatpush.msra.mxu0 %v1350
    %1528 = vmatpush.msra.mxu0 %v1326
    %1529 = vmatpush.msra.mxu0 %v1302
    %1530 = vmatpush.msra.mxu0 %v1278
    %1531 = vmatmul.f32.gmra.mxu0 %v1453
    %v1532 = vpop.f32.mrf.mxu0
    %v1533 = vadd.f32 0.0, %v1532
    %1534 = vdwg.mxu0
    %1535 = vmatpush.msra.mxu0 0.0
    %1536 = vmatpush.msra.mxu0 0.0
    %1537 = vmatpush.msra.mxu0 0.0
    %1538 = vmatpush.msra.mxu0 0.0
    %1539 = vmatpush.msra.mxu0 0.0
    %1540 = vmatpush.msra.mxu0 0.0
    %1541 = vmatpush.msra.mxu0 0.0
    %1542 = vmatpush.msra.mxu0 %v1444
    %1543 = vmatpush.msra.mxu0 %v1420
    %1544 = vmatpush.msra.mxu0 %v1396
    %1545 = vmatpush.msra.mxu0 %v1372
    %1546 = vmatpush.msra.mxu0 %v1254
    %1547 = vmatpush.msra.mxu0 %v1349
    %1548 = vmatpush.msra.mxu0 %v1325
    %1549 = vmatpush.msra.mxu0 %v1301
    %1550 = vmatpush.msra.mxu0 %v1277
    %1551 = vmatmul.f32.gmra.mxu0 %v1453
    %v1552 = vpop.f32.mrf.mxu0
    %v1553 = vadd.f32 0.0, %v1552
    %1554 = vdwg.mxu0
    %1555 = vmatpush.msra.mxu0 0.0
    %1556 = vmatpush.msra.mxu0 0.0
    %1557 = vmatpush.msra.mxu0 0.0
    %1558 = vmatpush.msra.mxu0 0.0
    %1559 = vmatpush.msra.mxu0 0.0
    %1560 = vmatpush.msra.mxu0 0.0
    %1561 = vmatpush.msra.mxu0 0.0
    %1562 = vmatpush.msra.mxu0 %v1443
    %1563 = vmatpush.msra.mxu0 %v1419
    %1564 = vmatpush.msra.mxu0 %v1395
    %1565 = vmatpush.msra.mxu0 %v1371
    %1566 = vmatpush.msra.mxu0 %v1255
    %1567 = vmatpush.msra.mxu0 %v1348
    %1568 = vmatpush.msra.mxu0 %v1324
    %1569 = vmatpush.msra.mxu0 %v1300
    %1570 = vmatpush.msra.mxu0 %v1276
    %1571 = vmatmul.f32.gmra.mxu0 %v1453
    %v1572 = vpop.f32.mrf.mxu0
    %v1573 = vadd.f32 0.0, %v1572
    %1574 = vdwg.mxu0
    %1575 = vmatpush.msra.mxu0 0.0
    %1576 = vmatpush.msra.mxu0 0.0
    %1577 = vmatpush.msra.mxu0 0.0
    %1578 = vmatpush.msra.mxu0 0.0
    %1579 = vmatpush.msra.mxu0 0.0
    %1580 = vmatpush.msra.mxu0 0.0
    %1581 = vmatpush.msra.mxu0 0.0
    %1582 = vmatpush.msra.mxu0 %v1442
    %1583 = vmatpush.msra.mxu0 %v1418
    %1584 = vmatpush.msra.mxu0 %v1394
    %1585 = vmatpush.msra.mxu0 %v1370
    %1586 = vmatpush.msra.mxu0 %v1256
    %1587 = vmatpush.msra.mxu0 %v1347
    %1588 = vmatpush.msra.mxu0 %v1323
    %1589 = vmatpush.msra.mxu0 %v1299
    %1590 = vmatpush.msra.mxu0 %v1275
    %1591 = vmatmul.f32.gmra.mxu0 %v1453
    %v1592 = vpop.f32.mrf.mxu0
    %v1593 = vadd.f32 0.0, %v1592
    %1594 = vdwg.mxu0
    %1595 = vmatpush.msra.mxu0 0.0
    %1596 = vmatpush.msra.mxu0 0.0
    %1597 = vmatpush.msra.mxu0 0.0
    %1598 = vmatpush.msra.mxu0 0.0
    %1599 = vmatpush.msra.mxu0 0.0
    %1600 = vmatpush.msra.mxu0 0.0
    %1601 = vmatpush.msra.mxu0 0.0
    %1602 = vmatpush.msra.mxu0 %v1449
    %1603 = vmatpush.msra.mxu0 %v1425
    %1604 = vmatpush.msra.mxu0 %v1401
    %1605 = vmatpush.msra.mxu0 %v1377
    %1606 = vmatpush.msra.mxu0 %v1257
    %1607 = vmatpush.msra.mxu0 %v1346
    %1608 = vmatpush.msra.mxu0 %v1322
    %1609 = vmatpush.msra.mxu0 %v1298
    %1610 = vmatpush.msra.mxu0 %v1274
    %1611 = vmatmul.f32.gmra.mxu0 %v1453
    %v1612 = vpop.f32.mrf.mxu0
    %v1613 = vadd.f32 0.0, %v1612
    %1614 = vdwg.mxu0
    %v1615 = vmul.f32 %v1473, %v454
    %v1616 = vmul.f32 %v1493, %v455
    %v1617 = vmul.f32 %v1513, %v456
    %v1618 = vmul.f32 %v1533, %v457
    %v1619 = vmul.f32 %v1553, %v458
    %v1620 = vmul.f32 %v1573, %v459
    %v1621 = vmul.f32 %v1593, %v460
    %v1622 = vmul.f32 %v1613, %v461
    %s1623 = scalar_lea.vmem [#allocation7], 192
    %v1624 = vld [vmem:[%s1623] sm:$0xff]
    %v1625 = vld [vmem:[%s1623 + $0x8] sm:$0xff]
    %v1626 = vld [vmem:[%s1623 + $0x10] sm:$0xff]
    %v1627 = vld [vmem:[%s1623 + $0x18] sm:$0xff]
    %v1628 = vld [vmem:[%s1623 + $0x20] sm:$0xff]
    %v1629 = vld [vmem:[%s1623 + $0x28] sm:$0xff]
    %v1630 = vld [vmem:[%s1623 + $0x30] sm:$0xff]
    %v1631 = vld [vmem:[%s1623 + $0x38] sm:$0xff]
    %v1632 = vadd.f32 %v1615, %v1624
    %v1633 = vadd.f32 %v1616, %v1625
    %v1634 = vadd.f32 %v1617, %v1626
    %v1635 = vadd.f32 %v1618, %v1627
    %v1636 = vadd.f32 %v1619, %v1628
    %v1637 = vadd.f32 %v1620, %v1629
    %v1638 = vadd.f32 %v1621, %v1630
    %v1639 = vadd.f32 %v1622, %v1631
    %1640 = vrot.lane.b32.xlu0 %v1632, 17
    %v1641 = vpop.permute.xlu0 %1640
    %1642 = vrot.lane.b32.xlu0 %v1633, 17
    %v1643 = vpop.permute.xlu0 %1642
    %1644 = vrot.lane.b32.xlu0 %v1634, 17
    %v1645 = vpop.permute.xlu0 %1644
    %1646 = vrot.lane.b32.xlu0 %v1635, 17
    %v1647 = vpop.permute.xlu0 %1646
    %1648 = vrot.lane.b32.xlu0 %v1636, 17
    %v1649 = vpop.permute.xlu0 %1648
    %1650 = vrot.lane.b32.xlu0 %v1637, 17
    %v1651 = vpop.permute.xlu0 %1650
    %1652 = vrot.lane.b32.xlu0 %v1638, 17
    %v1653 = vpop.permute.xlu0 %1652
    %1654 = vrot.lane.b32.xlu0 %v1639, 17
    %v1655 = vpop.permute.xlu0 %1654
    %v1656 = vsel %vm104, %v1653, %v1655
    %v1657 = vsel %vm104, %v1651, %v1653
    %v1658 = vsel %vm104, %v1649, %v1651
    %v1659 = vsel %vm104, %v1647, %v1649
    %v1660 = vsel %vm104, %v1645, %v1647
    %v1661 = vsel %vm104, %v1643, %v1645
    %v1662 = vsel %vm104, %v1641, %v1643
    %v1663 = vsel %vm104, %v1655, %v1641
    %1664 = vrot.lane.b32.xlu0 %v1632, 16
    %v1665 = vpop.permute.xlu0 %1664
    %1666 = vrot.lane.b32.xlu0 %v1633, 16
    %v1667 = vpop.permute.xlu0 %1666
    %1668 = vrot.lane.b32.xlu0 %v1634, 16
    %v1669 = vpop.permute.xlu0 %1668
    %1670 = vrot.lane.b32.xlu0 %v1635, 16
    %v1671 = vpop.permute.xlu0 %1670
    %1672 = vrot.lane.b32.xlu0 %v1636, 16
    %v1673 = vpop.permute.xlu0 %1672
    %1674 = vrot.lane.b32.xlu0 %v1637, 16
    %v1675 = vpop.permute.xlu0 %1674
    %1676 = vrot.lane.b32.xlu0 %v1638, 16
    %v1677 = vpop.permute.xlu0 %1676
    %1678 = vrot.lane.b32.xlu0 %v1639, 16
    %v1679 = vpop.permute.xlu0 %1678
    %v1680 = vsel %vm129, %v1677, %v1679
    %v1681 = vsel %vm129, %v1675, %v1677
    %v1682 = vsel %vm129, %v1673, %v1675
    %v1683 = vsel %vm129, %v1671, %v1673
    %v1684 = vsel %vm129, %v1669, %v1671
    %v1685 = vsel %vm129, %v1667, %v1669
    %v1686 = vsel %vm129, %v1665, %v1667
    %v1687 = vsel %vm129, %v1679, %v1665
    %1688 = vrot.lane.b32.xlu0 %v1632, 15
    %v1689 = vpop.permute.xlu0 %1688
    %1690 = vrot.lane.b32.xlu0 %v1633, 15
    %v1691 = vpop.permute.xlu0 %1690
    %1692 = vrot.lane.b32.xlu0 %v1634, 15
    %v1693 = vpop.permute.xlu0 %1692
    %1694 = vrot.lane.b32.xlu0 %v1635, 15
    %v1695 = vpop.permute.xlu0 %1694
    %1696 = vrot.lane.b32.xlu0 %v1636, 15
    %v1697 = vpop.permute.xlu0 %1696
    %1698 = vrot.lane.b32.xlu0 %v1637, 15
    %v1699 = vpop.permute.xlu0 %1698
    %1700 = vrot.lane.b32.xlu0 %v1638, 15
    %v1701 = vpop.permute.xlu0 %1700
    %1702 = vrot.lane.b32.xlu0 %v1639, 15
    %v1703 = vpop.permute.xlu0 %1702
    %v1704 = vsel %vm154, %v1701, %v1703
    %v1705 = vsel %vm154, %v1699, %v1701
    %v1706 = vsel %vm154, %v1697, %v1699
    %v1707 = vsel %vm154, %v1695, %v1697
    %v1708 = vsel %vm154, %v1693, %v1695
    %v1709 = vsel %vm154, %v1691, %v1693
    %v1710 = vsel %vm154, %v1689, %v1691
    %v1711 = vsel %vm154, %v1703, %v1689
    %1712 = vrot.lane.b32.xlu0 %v1632, 1
    %v1713 = vpop.permute.xlu0 %1712
    %1714 = vrot.lane.b32.xlu0 %v1633, 1
    %v1715 = vpop.permute.xlu0 %1714
    %1716 = vrot.lane.b32.xlu0 %v1634, 1
    %v1717 = vpop.permute.xlu0 %1716
    %1718 = vrot.lane.b32.xlu0 %v1635, 1
    %v1719 = vpop.permute.xlu0 %1718
    %1720 = vrot.lane.b32.xlu0 %v1636, 1
    %v1721 = vpop.permute.xlu0 %1720
    %1722 = vrot.lane.b32.xlu0 %v1637, 1
    %v1723 = vpop.permute.xlu0 %1722
    %1724 = vrot.lane.b32.xlu0 %v1638, 1
    %v1725 = vpop.permute.xlu0 %1724
    %1726 = vrot.lane.b32.xlu0 %v1639, 1
    %v1727 = vpop.permute.xlu0 %1726
    %v1728 = vsel %vm179, %v1725, %v1727
    %v1729 = vsel %vm179, %v1723, %v1725
    %v1730 = vsel %vm179, %v1721, %v1723
    %v1731 = vsel %vm179, %v1719, %v1721
    %v1732 = vsel %vm179, %v1717, %v1719
    %v1733 = vsel %vm179, %v1715, %v1717
    %v1734 = vsel %vm179, %v1713, %v1715
    %v1735 = vsel %vm179, %v1727, %v1713
    %1736 = vrot.lane.b32.xlu0 %v1632, 127
    %v1737 = vpop.permute.xlu0 %1736
    %1738 = vrot.lane.b32.xlu0 %v1633, 127
    %v1739 = vpop.permute.xlu0 %1738
    %1740 = vrot.lane.b32.xlu0 %v1634, 127
    %v1741 = vpop.permute.xlu0 %1740
    %1742 = vrot.lane.b32.xlu0 %v1635, 127
    %v1743 = vpop.permute.xlu0 %1742
    %1744 = vrot.lane.b32.xlu0 %v1636, 127
    %v1745 = vpop.permute.xlu0 %1744
    %1746 = vrot.lane.b32.xlu0 %v1637, 127
    %v1747 = vpop.permute.xlu0 %1746
    %1748 = vrot.lane.b32.xlu0 %v1638, 127
    %v1749 = vpop.permute.xlu0 %1748
    %1750 = vrot.lane.b32.xlu0 %v1639, 127
    %v1751 = vpop.permute.xlu0 %1750
    %v1752 = vsel %vm204, %v1749, %v1751
    %v1753 = vsel %vm204, %v1747, %v1749
    %v1754 = vsel %vm204, %v1745, %v1747
    %v1755 = vsel %vm204, %v1743, %v1745
    %v1756 = vsel %vm204, %v1741, %v1743
    %v1757 = vsel %vm204, %v1739, %v1741
    %v1758 = vsel %vm204, %v1737, %v1739
    %v1759 = vsel %vm204, %v1751, %v1737
    %1760 = vrot.lane.b32.xlu0 %v1632, 113
    %v1761 = vpop.permute.xlu0 %1760
    %1762 = vrot.lane.b32.xlu0 %v1633, 113
    %v1763 = vpop.permute.xlu0 %1762
    %1764 = vrot.lane.b32.xlu0 %v1634, 113
    %v1765 = vpop.permute.xlu0 %1764
    %1766 = vrot.lane.b32.xlu0 %v1635, 113
    %v1767 = vpop.permute.xlu0 %1766
    %1768 = vrot.lane.b32.xlu0 %v1636, 113
    %v1769 = vpop.permute.xlu0 %1768
    %1770 = vrot.lane.b32.xlu0 %v1637, 113
    %v1771 = vpop.permute.xlu0 %1770
    %1772 = vrot.lane.b32.xlu0 %v1638, 113
    %v1773 = vpop.permute.xlu0 %1772
    %1774 = vrot.lane.b32.xlu0 %v1639, 113
    %v1775 = vpop.permute.xlu0 %1774
    %v1776 = vsel %vm229, %v1773, %v1775
    %v1777 = vsel %vm229, %v1771, %v1773
    %v1778 = vsel %vm229, %v1769, %v1771
    %v1779 = vsel %vm229, %v1767, %v1769
    %v1780 = vsel %vm229, %v1765, %v1767
    %v1781 = vsel %vm229, %v1763, %v1765
    %v1782 = vsel %vm229, %v1761, %v1763
    %v1783 = vsel %vm229, %v1775, %v1761
    %1784 = vrot.lane.b32.xlu0 %v1632, 112
    %v1785 = vpop.permute.xlu0 %1784
    %1786 = vrot.lane.b32.xlu0 %v1633, 112
    %v1787 = vpop.permute.xlu0 %1786
    %1788 = vrot.lane.b32.xlu0 %v1634, 112
    %v1789 = vpop.permute.xlu0 %1788
    %1790 = vrot.lane.b32.xlu0 %v1635, 112
    %v1791 = vpop.permute.xlu0 %1790
    %1792 = vrot.lane.b32.xlu0 %v1636, 112
    %v1793 = vpop.permute.xlu0 %1792
    %1794 = vrot.lane.b32.xlu0 %v1637, 112
    %v1795 = vpop.permute.xlu0 %1794
    %1796 = vrot.lane.b32.xlu0 %v1638, 112
    %v1797 = vpop.permute.xlu0 %1796
    %1798 = vrot.lane.b32.xlu0 %v1639, 112
    %v1799 = vpop.permute.xlu0 %1798
    %v1800 = vsel %vm254, %v1797, %v1799
    %v1801 = vsel %vm254, %v1795, %v1797
    %v1802 = vsel %vm254, %v1793, %v1795
    %v1803 = vsel %vm254, %v1791, %v1793
    %v1804 = vsel %vm254, %v1789, %v1791
    %v1805 = vsel %vm254, %v1787, %v1789
    %v1806 = vsel %vm254, %v1785, %v1787
    %v1807 = vsel %vm254, %v1799, %v1785
    %1808 = vrot.lane.b32.xlu0 %v1632, 111
    %v1809 = vpop.permute.xlu0 %1808
    %1810 = vrot.lane.b32.xlu0 %v1633, 111
    %v1811 = vpop.permute.xlu0 %1810
    %1812 = vrot.lane.b32.xlu0 %v1634, 111
    %v1813 = vpop.permute.xlu0 %1812
    %1814 = vrot.lane.b32.xlu0 %v1635, 111
    %v1815 = vpop.permute.xlu0 %1814
    %1816 = vrot.lane.b32.xlu0 %v1636, 111
    %v1817 = vpop.permute.xlu0 %1816
    %1818 = vrot.lane.b32.xlu0 %v1637, 111
    %v1819 = vpop.permute.xlu0 %1818
    %1820 = vrot.lane.b32.xlu0 %v1638, 111
    %v1821 = vpop.permute.xlu0 %1820
    %1822 = vrot.lane.b32.xlu0 %v1639, 111
    %v1823 = vpop.permute.xlu0 %1822
    %v1824 = vsel %vm279, %v1821, %v1823
    %v1825 = vsel %vm279, %v1819, %v1821
    %v1826 = vsel %vm279, %v1817, %v1819
    %v1827 = vsel %vm279, %v1815, %v1817
    %v1828 = vsel %vm279, %v1813, %v1815
    %v1829 = vsel %vm279, %v1811, %v1813
    %v1830 = vsel %vm279, %v1809, %v1811
    %v1831 = vsel %vm279, %v1823, %v1809
    %s1832 = scalar_lea.vmem [#allocation5], 32
    %v1833 = vld [vmem:[%s1832] sm:$0xff]
    %v1835 = vsel %vm289, %v1833, 0
    %1837 = vmatpush.msra.mxu0 0.0
    %1838 = vmatpush.msra.mxu0 0.0
    %1839 = vmatpush.msra.mxu0 0.0
    %1840 = vmatpush.msra.mxu0 0.0
    %1841 = vmatpush.msra.mxu0 0.0
    %1842 = vmatpush.msra.mxu0 0.0
    %1843 = vmatpush.msra.mxu0 0.0
    %1844 = vmatpush.msra.mxu0 %v1830
    %1845 = vmatpush.msra.mxu0 %v1806
    %1846 = vmatpush.msra.mxu0 %v1782
    %1847 = vmatpush.msra.mxu0 %v1758
    %1848 = vmatpush.msra.mxu0 %v1632
    %1849 = vmatpush.msra.mxu0 %v1735
    %1850 = vmatpush.msra.mxu0 %v1711
    %1851 = vmatpush.msra.mxu0 %v1687
    %1852 = vmatpush.msra.mxu0 %v1663
    %1853 = vmatmul.f32.gmra.mxu0 %v1835
    %v1854 = vpop.f32.mrf.mxu0
    %v1855 = vadd.f32 0.0, %v1854
    %1856 = vdwg.mxu0
    %1857 = vmatpush.msra.mxu0 0.0
    %1858 = vmatpush.msra.mxu0 0.0
    %1859 = vmatpush.msra.mxu0 0.0
    %1860 = vmatpush.msra.mxu0 0.0
    %1861 = vmatpush.msra.mxu0 0.0
    %1862 = vmatpush.msra.mxu0 0.0
    %1863 = vmatpush.msra.mxu0 0.0
    %1864 = vmatpush.msra.mxu0 %v1829
    %1865 = vmatpush.msra.mxu0 %v1805
    %1866 = vmatpush.msra.mxu0 %v1781
    %1867 = vmatpush.msra.mxu0 %v1757
    %1868 = vmatpush.msra.mxu0 %v1633
    %1869 = vmatpush.msra.mxu0 %v1734
    %1870 = vmatpush.msra.mxu0 %v1710
    %1871 = vmatpush.msra.mxu0 %v1686
    %1872 = vmatpush.msra.mxu0 %v1662
    %1873 = vmatmul.f32.gmra.mxu0 %v1835
    %v1874 = vpop.f32.mrf.mxu0
    %v1875 = vadd.f32 0.0, %v1874
    %1876 = vdwg.mxu0
    %1877 = vmatpush.msra.mxu0 0.0
    %1878 = vmatpush.msra.mxu0 0.0
    %1879 = vmatpush.msra.mxu0 0.0
    %1880 = vmatpush.msra.mxu0 0.0
    %1881 = vmatpush.msra.mxu0 0.0
    %1882 = vmatpush.msra.mxu0 0.0
    %1883 = vmatpush.msra.mxu0 0.0
    %1884 = vmatpush.msra.mxu0 %v1828
    %1885 = vmatpush.msra.mxu0 %v1804
    %1886 = vmatpush.msra.mxu0 %v1780
    %1887 = vmatpush.msra.mxu0 %v1756
    %1888 = vmatpush.msra.mxu0 %v1634
    %1889 = vmatpush.msra.mxu0 %v1733
    %1890 = vmatpush.msra.mxu0 %v1709
    %1891 = vmatpush.msra.mxu0 %v1685
    %1892 = vmatpush.msra.mxu0 %v1661
    %1893 = vmatmul.f32.gmra.mxu0 %v1835
    %v1894 = vpop.f32.mrf.mxu0
    %v1895 = vadd.f32 0.0, %v1894
    %1896 = vdwg.mxu0
    %1897 = vmatpush.msra.mxu0 0.0
    %1898 = vmatpush.msra.mxu0 0.0
    %1899 = vmatpush.msra.mxu0 0.0
    %1900 = vmatpush.msra.mxu0 0.0
    %1901 = vmatpush.msra.mxu0 0.0
    %1902 = vmatpush.msra.mxu0 0.0
    %1903 = vmatpush.msra.mxu0 0.0
    %1904 = vmatpush.msra.mxu0 %v1827
    %1905 = vmatpush.msra.mxu0 %v1803
    %1906 = vmatpush.msra.mxu0 %v1779
    %1907 = vmatpush.msra.mxu0 %v1755
    %1908 = vmatpush.msra.mxu0 %v1635
    %1909 = vmatpush.msra.mxu0 %v1732
    %1910 = vmatpush.msra.mxu0 %v1708
    %1911 = vmatpush.msra.mxu0 %v1684
    %1912 = vmatpush.msra.mxu0 %v1660
    %1913 = vmatmul.f32.gmra.mxu0 %v1835
    %v1914 = vpop.f32.mrf.mxu0
    %v1915 = vadd.f32 0.0, %v1914
    %1916 = vdwg.mxu0
    %1917 = vmatpush.msra.mxu0 0.0
    %1918 = vmatpush.msra.mxu0 0.0
    %1919 = vmatpush.msra.mxu0 0.0
    %1920 = vmatpush.msra.mxu0 0.0
    %1921 = vmatpush.msra.mxu0 0.0
    %1922 = vmatpush.msra.mxu0 0.0
    %1923 = vmatpush.msra.mxu0 0.0
    %1924 = vmatpush.msra.mxu0 %v1826
    %1925 = vmatpush.msra.mxu0 %v1802
    %1926 = vmatpush.msra.mxu0 %v1778
    %1927 = vmatpush.msra.mxu0 %v1754
    %1928 = vmatpush.msra.mxu0 %v1636
    %1929 = vmatpush.msra.mxu0 %v1731
    %1930 = vmatpush.msra.mxu0 %v1707
    %1931 = vmatpush.msra.mxu0 %v1683
    %1932 = vmatpush.msra.mxu0 %v1659
    %1933 = vmatmul.f32.gmra.mxu0 %v1835
    %v1934 = vpop.f32.mrf.mxu0
    %v1935 = vadd.f32 0.0, %v1934
    %1936 = vdwg.mxu0
    %1937 = vmatpush.msra.mxu0 0.0
    %1938 = vmatpush.msra.mxu0 0.0
    %1939 = vmatpush.msra.mxu0 0.0
    %1940 = vmatpush.msra.mxu0 0.0
    %1941 = vmatpush.msra.mxu0 0.0
    %1942 = vmatpush.msra.mxu0 0.0
    %1943 = vmatpush.msra.mxu0 0.0
    %1944 = vmatpush.msra.mxu0 %v1825
    %1945 = vmatpush.msra.mxu0 %v1801
    %1946 = vmatpush.msra.mxu0 %v1777
    %1947 = vmatpush.msra.mxu0 %v1753
    %1948 = vmatpush.msra.mxu0 %v1637
    %1949 = vmatpush.msra.mxu0 %v1730
    %1950 = vmatpush.msra.mxu0 %v1706
    %1951 = vmatpush.msra.mxu0 %v1682
    %1952 = vmatpush.msra.mxu0 %v1658
    %1953 = vmatmul.f32.gmra.mxu0 %v1835
    %v1954 = vpop.f32.mrf.mxu0
    %v1955 = vadd.f32 0.0, %v1954
    %1956 = vdwg.mxu0
    %1957 = vmatpush.msra.mxu0 0.0
    %1958 = vmatpush.msra.mxu0 0.0
    %1959 = vmatpush.msra.mxu0 0.0
    %1960 = vmatpush.msra.mxu0 0.0
    %1961 = vmatpush.msra.mxu0 0.0
    %1962 = vmatpush.msra.mxu0 0.0
    %1963 = vmatpush.msra.mxu0 0.0
    %1964 = vmatpush.msra.mxu0 %v1824
    %1965 = vmatpush.msra.mxu0 %v1800
    %1966 = vmatpush.msra.mxu0 %v1776
    %1967 = vmatpush.msra.mxu0 %v1752
    %1968 = vmatpush.msra.mxu0 %v1638
    %1969 = vmatpush.msra.mxu0 %v1729
    %1970 = vmatpush.msra.mxu0 %v1705
    %1971 = vmatpush.msra.mxu0 %v1681
    %1972 = vmatpush.msra.mxu0 %v1657
    %1973 = vmatmul.f32.gmra.mxu0 %v1835
    %v1974 = vpop.f32.mrf.mxu0
    %v1975 = vadd.f32 0.0, %v1974
    %1976 = vdwg.mxu0
    %1977 = vmatpush.msra.mxu0 0.0
    %1978 = vmatpush.msra.mxu0 0.0
    %1979 = vmatpush.msra.mxu0 0.0
    %1980 = vmatpush.msra.mxu0 0.0
    %1981 = vmatpush.msra.mxu0 0.0
    %1982 = vmatpush.msra.mxu0 0.0
    %1983 = vmatpush.msra.mxu0 0.0
    %1984 = vmatpush.msra.mxu0 %v1831
    %1985 = vmatpush.msra.mxu0 %v1807
    %1986 = vmatpush.msra.mxu0 %v1783
    %1987 = vmatpush.msra.mxu0 %v1759
    %1988 = vmatpush.msra.mxu0 %v1639
    %1989 = vmatpush.msra.mxu0 %v1728
    %1990 = vmatpush.msra.mxu0 %v1704
    %1991 = vmatpush.msra.mxu0 %v1680
    %1992 = vmatpush.msra.mxu0 %v1656
    %1993 = vmatmul.f32.gmra.mxu0 %v1835
    %v1994 = vpop.f32.mrf.mxu0
    %v1995 = vadd.f32 0.0, %v1994
    %1996 = vdwg.mxu0
    %v1997 = vmul.f32 %v1855, %v454
    %v1998 = vmul.f32 %v1875, %v455
    %v1999 = vmul.f32 %v1895, %v456
    %v2000 = vmul.f32 %v1915, %v457
    %v2001 = vmul.f32 %v1935, %v458
    %v2002 = vmul.f32 %v1955, %v459
    %v2003 = vmul.f32 %v1975, %v460
    %v2004 = vmul.f32 %v1995, %v461
    %s2005 = scalar_lea.vmem [#allocation7], 256
    %v2006 = vld [vmem:[%s2005] sm:$0xff]
    %v2007 = vld [vmem:[%s2005 + $0x8] sm:$0xff]
    %v2008 = vld [vmem:[%s2005 + $0x10] sm:$0xff]
    %v2009 = vld [vmem:[%s2005 + $0x18] sm:$0xff]
    %v2010 = vld [vmem:[%s2005 + $0x20] sm:$0xff]
    %v2011 = vld [vmem:[%s2005 + $0x28] sm:$0xff]
    %v2012 = vld [vmem:[%s2005 + $0x30] sm:$0xff]
    %v2013 = vld [vmem:[%s2005 + $0x38] sm:$0xff]
    %v2014 = vadd.f32 %v1997, %v2006
    %v2015 = vadd.f32 %v1998, %v2007
    %v2016 = vadd.f32 %v1999, %v2008
    %v2017 = vadd.f32 %v2000, %v2009
    %v2018 = vadd.f32 %v2001, %v2010
    %v2019 = vadd.f32 %v2002, %v2011
    %v2020 = vadd.f32 %v2003, %v2012
    %v2021 = vadd.f32 %v2004, %v2013
    %2022 = vst [vmem:[#allocation10] sm:$0xff] %v2014
    %2023 = vst [vmem:[#allocation10 + $0x8] sm:$0xff] %v2015
    %2024 = vst [vmem:[#allocation10 + $0x10] sm:$0xff] %v2016
    %2025 = vst [vmem:[#allocation10 + $0x18] sm:$0xff] %v2017
    %2026 = vst [vmem:[#allocation10 + $0x20] sm:$0xff] %v2018
    %2027 = vst [vmem:[#allocation10 + $0x28] sm:$0xff] %v2019
    %2028 = vst [vmem:[#allocation10 + $0x30] sm:$0xff] %v2020
    %2029 = vst [vmem:[#allocation10 + $0x38] sm:$0xff] %v2021
    // Predicated region
    $region34: #{tpu_custom_call.1} parent=1 // pred_check
      _
    $region35: #{tpu_custom_call.1} parent=1 // pred_check_branch
      %2031 = sbr.rel (0) target = $region37
    $region36: #{tpu_custom_call.1} parent=1 // pred_region
      %2033 = vsyncadd [#allocation4], 0
      %s2035 = sshll.u32 [#allocation10], 4
      %s2036 = int_to_ptr.vmem [resolvable:$true] %s2035
      %s2037 = sshll.u32 %s4, 4
      %s2038 = int_to_ptr.hbm [resolvable:$true] %s2037
      %2040 = dma.vmem_to_hbm [thread:$0]  %s2036, 1024, %s2038, [#allocation4]
    $region37: #{tpu_custom_call.1} parent=1 // pred_fallthru
      _
    // Predicated region
    $region38: #{tpu_custom_call.1} parent=1 // pred_check
      _
    $region39: #{tpu_custom_call.1} parent=1 // pred_check_branch
      %2042 = sbr.rel (0) target = $region41
    $region40: #{tpu_custom_call.1} parent=1 // pred_region
      %2044 = dma.done [#allocation4], 1024
    $region41: #{tpu_custom_call.1} parent=1 // pred_fallthru
      _
    %2045 = vsyncpa [#allocation3], 1
    %2046 = vsyncpa [#allocation6], 1
    %2047 = vsyncpa [#allocation9], 1
    %2048 = vsyncpa [#allocation4], 1

</llo_original>
